<compile_context>
chip_gen: v7x
topology: tpu7x:2x2x1
jax: 0.10.0
libtpu: 0.0.40
codegen_flags: <defaults>
</compile_context>

<pallas_src>
import functools
import math

import jax
import jax.numpy as jnp
from jax.experimental import pallas as pl
from jax.experimental.pallas import tpu as pltpu

NEG_INF = -1.0e9


# ----------------------------- in-kernel math helpers -----------------------------
def _gelu(x):
    # BERT-style tanh approximation of GELU (f32 math).
    return 0.5 * x * (1.0 + jnp.tanh(0.7978845608028654 * (x + 0.044715 * x * x * x)))


def _layer_norm(x, g, b, eps=1e-6):
    m = jnp.mean(x, axis=-1, keepdims=True)
    v = jnp.mean((x - m) * (x - m), axis=-1, keepdims=True)
    return (x - m) * jax.lax.rsqrt(v + eps) * g + b


def _softmax_last(x):
    m = jnp.max(x, axis=-1, keepdims=True)
    e = jnp.exp(x - m)
    # Divide on the EUP (approx reciprocal) instead of the VALU.
    return e * pl.reciprocal(jnp.sum(e, axis=-1, keepdims=True), approx=True)


# ----------------------------- DPBL encoder layer kernel -----------------------------
def layer_kernel(x_ref, am_ref,
                 wqkv_ref, bqkv_ref, wo_ref, bo_ref,
                 w1_ref, b1_ref, w2_ref, b2_ref,
                 ln1g_ref, ln1b_ref, ln2g_ref, ln2b_ref, pref_ref,
                 *out_refs, heads, emit_attn):
    if emit_attn:
        xout_ref, attn1_ref, attn2_ref, hid_ref = out_refs
    else:
        xout_ref, hid_ref = out_refs

    Bt, S, H = x_ref.shape
    d = H // heads

    am = am_ref[...]                                   # (Bt, 1, S) additive mask, f32
    x2d = x_ref[...].reshape(Bt * S, H)                # bf16, flattened for tall-M matmuls

    # ---- fused QKV projection: one [Bt*S, H] x [H, 3H] bf16 MXU matmul ----
    # (1/sqrt(d) scale is pre-folded into the Q columns of wqkv at init.)
    qkv = (jnp.dot(x2d, wqkv_ref[...], preferred_element_type=jnp.float32)
           + bqkv_ref[...]).astype(jnp.bfloat16)       # (Bt*S, 3H)

    # ---- multi-head self attention ----
    # TODO(synk): a fully batched 'bhqd,bhkd->bhqk' formulation needs a
    # seq<->head relayout of the fused projection; contiguous-lane slices +
    # single-leading-batch einsums are the Mosaic-safe form and are kept here.
    ctx_heads = []
    for h in range(heads):
        lo = h * d
        qh = qkv[:, lo:lo + d].reshape(Bt, S, d)
        kh = qkv[:, H + lo:H + lo + d].reshape(Bt, S, d)
        vh = qkv[:, 2 * H + lo:2 * H + lo + d].reshape(Bt, S, d)
        s = jnp.einsum('bqd,bkd->bqk', qh, kh,
                       preferred_element_type=jnp.float32) + am
        a = _softmax_last(s)                           # (Bt, S, S) f32
        if emit_attn:
            attn1_ref[:, h] = a                        # one vectorized store per head
        ctx_h = jnp.einsum('bqk,bkd->bqd', a.astype(jnp.bfloat16), vh,
                           preferred_element_type=jnp.float32)
        ctx_heads.append(ctx_h.reshape(Bt * S, d))

    # Single full-width output projection instead of `heads` narrow matmuls.
    ctx = jnp.concatenate(ctx_heads, axis=-1).astype(jnp.bfloat16)    # (Bt*S, H)
    attn_out = jnp.dot(ctx, wo_ref[...], preferred_element_type=jnp.float32) + bo_ref[...]

    # Residual cast at the point of use (keeps the f32 activation live range short).
    x1 = _layer_norm(x2d.astype(jnp.float32) + attn_out, ln1g_ref[...], ln1b_ref[...])

    # ---- feed-forward (GELU), residual, LayerNorm ----
    hff = _gelu(jnp.dot(x1.astype(jnp.bfloat16), w1_ref[...],
                        preferred_element_type=jnp.float32) + b1_ref[...])
    ff = jnp.dot(hff.astype(jnp.bfloat16), w2_ref[...],
                 preferred_element_type=jnp.float32) + b2_ref[...]
    x2 = _layer_norm(x1 + ff, ln2g_ref[...], ln2b_ref[...])           # (Bt*S, H) f32

    x2_3d = x2.astype(jnp.bfloat16).reshape(Bt, S, H)
    xout_ref[...] = x2_3d

    # ---- preference attention (pref pre-scaled by 1/sqrt(H) at init) ----
    P = pref_ref.shape[0]
    pref_b = jnp.broadcast_to(pref_ref[...], (Bt, P, H))
    ps = jnp.einsum('bph,bsh->bps', pref_b, x2_3d,
                    preferred_element_type=jnp.float32) + am
    a2 = _softmax_last(ps)                                            # (Bt, P, S) f32
    if emit_attn:
        attn2_ref[...] = a2                                           # single block store
    hid_ref[...] = jnp.einsum('bps,bsh->bph', a2.astype(jnp.bfloat16), x2_3d,
                              preferred_element_type=jnp.float32).astype(jnp.bfloat16)


# ----------------------------- DPBL output-head kernel -----------------------------
def head_kernel(x_ref, am_ref, w1_ref, b1_ref, w2_ref, b2_ref, lng_ref, lnb_ref,
                out_ref):
    Bt, S, H = x_ref.shape
    x3 = x_ref[...]                                    # (Bt, S, H) bf16
    x2d = x3.reshape(Bt * S, H)

    h = _gelu(jnp.dot(x2d, w1_ref[...], preferred_element_type=jnp.float32) + b1_ref[...])
    scores = jnp.dot(h.astype(jnp.bfloat16), w2_ref[...],
                     preferred_element_type=jnp.float32) + b2_ref[...]        # (Bt*S, 1)

    # Bring scores to a lane-major (Bt, 1, S) layout (single minor transpose),
    # add the key-side additive mask, and do ONE batched lane-axis softmax.
    st = jnp.swapaxes(scores.reshape(Bt, S, 1), 1, 2) + am_ref[...]           # (Bt, 1, S)
    w = _softmax_last(st)                                                     # (Bt, 1, S)

    # One batched pooling matmul [1,S]x[S,H] per batch row, lane-dense [Bt,1,H] out.
    pooled = jnp.einsum('bqs,bsh->bqh', w.astype(jnp.bfloat16), x3,
                        preferred_element_type=jnp.float32)                   # (Bt, 1, H)
    out_ref[...] = _layer_norm(pooled, lng_ref[...], lnb_ref[...])            # block store


# ----------------------------- hardware / spec helpers -----------------------------
def _tiny_copy_kernel(x_ref, o_ref):
    o_ref[...] = x_ref[...]


@functools.lru_cache(maxsize=None)
def _single_buffer_ok():
    """Probe once whether this JAX build accepts pl.Buffered(1) on a BlockSpec."""
    try:
        spec = pl.BlockSpec((8, 128), lambda i: (0, 0), pipeline_mode=pl.Buffered(1))
        out = pl.pallas_call(
            _tiny_copy_kernel,
            grid=(1,),
            in_specs=[spec],
            out_specs=pl.BlockSpec((8, 128), lambda i: (0, 0)),
            out_shape=jax.ShapeDtypeStruct((8, 128), jnp.float32),
        )(jnp.zeros((8, 128), jnp.float32))
        jax.block_until_ready(out)
        return True
    except Exception:
        return False


@functools.lru_cache(maxsize=None)
def _vmem_capacity_bytes():
    try:
        return int(pltpu.get_tpu_info().vmem_capacity_bytes)
    except Exception:
        return 64 * 1024 * 1024       # v7x floor (smallest per-core VMEM of the targets)


def _weight_spec(arr):
    """Grid-invariant (whole-array) weight BlockSpec; single-buffered if supported."""
    nd = arr.ndim
    index_map = lambda i, nd=nd: (0,) * nd
    if _single_buffer_ok():
        return pl.BlockSpec(arr.shape, index_map, pipeline_mode=pl.Buffered(1))
    return pl.BlockSpec(arr.shape, index_map)


def _compiler_params():
    cap = _vmem_capacity_bytes()
    # Leave headroom below physical capacity for compiler scratch.
    return pltpu.CompilerParams(
        dimension_semantics=("parallel",),
        vmem_limit_bytes=min(cap * 3 // 4, 96 * 1024 * 1024))


def _vmem_bytes_estimate(bt, S, H, P):
    """Rough per-grid-step VMEM footprint of the layer kernel (dominant terms)."""
    act_io = 2 * (bt * S * H * 2) * 2            # x-in + x-out blocks, bf16, double-buffered
    qkv = bt * S * 3 * H * 4                     # f32 fused projection
    scores = 2 * bt * S * S * 4                  # one head's f32 scores + probs live at a time
    ctx = bt * S * H * 4                         # f32 context / residual temporaries
    pref = bt * P * (S + H) * 4
    weights = (3 * H * H + H * H + 2 * H * H + P * H) * 2   # bf16 weights
    wbuf = weights if _single_buffer_ok() else 2 * weights
    return act_io + qkv + scores + ctx + pref + wbuf


def _pick_batch_block(B, S, H, P):
    """Largest bt whose layer-kernel footprint fits the VMEM budget.

    Only splits the grid (>= 2 steps, to feed both v7x TensorCores) when the
    split keeps the matmul M dimension (bt*S) at an MXU-friendly >= 256 rows;
    on single-TC chips (v5e/v6e) extra grid steps are a serial loop, so the
    largest fitting bt is kept otherwise.
    """
    budget = _vmem_capacity_bytes() // 2
    divisors = [d for d in range(1, B + 1) if B % d == 0]
    fits = [d for d in divisors if _vmem_bytes_estimate(d, S, H, P) <= budget] or [1]
    bt = max(fits)
    if bt == B:
        smaller = [d for d in fits if d < B and d * S >= 256]
        if smaller:
            bt = max(smaller)
    return bt


# ----------------------------- wrappers (pallas_call plumbing) -----------------------------
def run_layer(x, addmask_k, lp, heads, emit_attn, bt):
    B, S, H = x.shape
    P = lp["pref"].shape[0]
    assert B % bt == 0

    w_names = ("wqkv", "bqkv", "wo", "bo", "w1", "b1", "w2", "b2",
               "ln1g", "ln1b", "ln2g", "ln2b", "pref")
    w_list = [lp[n] for n in w_names]

    in_specs = [pl.BlockSpec((bt, S, H), lambda i: (i, 0, 0)),
                pl.BlockSpec((bt, 1, S), lambda i: (i, 0, 0))]
    in_specs += [_weight_spec(w) for w in w_list]

    if emit_attn:
        out_specs = (pl.BlockSpec((bt, S, H), lambda i: (i, 0, 0)),
                     pl.BlockSpec((bt, heads, S, S), lambda i: (i, 0, 0, 0)),
                     pl.BlockSpec((bt, P, S), lambda i: (i, 0, 0)),
                     pl.BlockSpec((bt, P, H), lambda i: (i, 0, 0)))
        out_shape = (jax.ShapeDtypeStruct((B, S, H), jnp.bfloat16),
                     jax.ShapeDtypeStruct((B, heads, S, S), jnp.float32),
                     jax.ShapeDtypeStruct((B, P, S), jnp.float32),
                     jax.ShapeDtypeStruct((B, P, H), jnp.bfloat16))
    else:
        out_specs = (pl.BlockSpec((bt, S, H), lambda i: (i, 0, 0)),
                     pl.BlockSpec((bt, P, H), lambda i: (i, 0, 0)))
        out_shape = (jax.ShapeDtypeStruct((B, S, H), jnp.bfloat16),
                     jax.ShapeDtypeStruct((B, P, H), jnp.bfloat16))

    return pl.pallas_call(
        functools.partial(layer_kernel, heads=heads, emit_attn=emit_attn),
        grid=(B // bt,),
        in_specs=in_specs,
        out_specs=out_specs,
        out_shape=out_shape,
        compiler_params=_compiler_params(),
    )(x, addmask_k, *w_list)


def run_head(x, addmask_k, hp, bt):
    B, S, H = x.shape
    assert B % bt == 0
    w_list = [hp[n] for n in ("w1", "b1", "w2", "b2", "g", "b")]

    in_specs = [pl.BlockSpec((bt, S, H), lambda i: (i, 0, 0)),
                pl.BlockSpec((bt, 1, S), lambda i: (i, 0, 0))]
    in_specs += [_weight_spec(w) for w in w_list]

    out_specs = pl.BlockSpec((bt, 1, H), lambda i: (i, 0, 0))
    out_shape = jax.ShapeDtypeStruct((B, 1, H), jnp.float32)

    return pl.pallas_call(
        head_kernel,
        grid=(B // bt,),
        in_specs=in_specs,
        out_specs=out_specs,
        out_shape=out_shape,
        compiler_params=_compiler_params(),
    )(x, addmask_k, *w_list)


# ----------------------------- parameter init & top-level forward -----------------------------
def init_dpbl_params(key, vocab, max_len, H, heads, P, n_layers):
    H4 = H // 4
    FF = H  # DPBLLayer(hidden, attn_heads, hidden, ...) -> feed-forward width = hidden
    d = H // heads
    bf16 = jnp.bfloat16

    def nrm(k, shape):
        return jax.random.normal(k, shape, jnp.float32) * 0.02

    keys = jax.random.split(key, 2 + n_layers + 1)
    params = {
        "tok_emb": nrm(keys[0], (vocab, H)),
        "pos_emb": nrm(keys[1], (max_len, H)),
        "layers": [],
    }
    q_scale = 1.0 / math.sqrt(d)
    p_scale = 1.0 / math.sqrt(H)
    for li in range(n_layers):
        lk = jax.random.split(keys[2 + li], 8)
        # Attention scale folded into the Q columns (bias is zero so no bias scaling needed).
        wq = nrm(lk[0], (H, H)) * q_scale
        wk, wv = nrm(lk[1], (H, H)), nrm(lk[2], (H, H))
        params["layers"].append({
            "wqkv": jnp.concatenate([wq, wk, wv], axis=1).astype(bf16),   # (H, 3H)
            "bqkv": jnp.zeros((1, 3 * H), jnp.float32),
            "wo": nrm(lk[3], (H, H)).astype(bf16), "bo": jnp.zeros((1, H), jnp.float32),
            "w1": nrm(lk[4], (H, FF)).astype(bf16), "b1": jnp.zeros((1, FF), jnp.float32),
            "w2": nrm(lk[5], (FF, H)).astype(bf16), "b2": jnp.zeros((1, H), jnp.float32),
            "ln1g": jnp.ones((1, H), jnp.float32), "ln1b": jnp.zeros((1, H), jnp.float32),
            "ln2g": jnp.ones((1, H), jnp.float32), "ln2b": jnp.zeros((1, H), jnp.float32),
            # 1/sqrt(H) preference-attention scale folded into the preference vectors.
            "pref": (nrm(lk[6], (P, H)) * p_scale).astype(bf16),
        })
    hk = jax.random.split(keys[-1], 2)
    params["head"] = {
        "w1": nrm(hk[0], (H, H4)).astype(bf16), "b1": jnp.zeros((1, H4), jnp.float32),
        "w2": nrm(hk[1], (H4, 1)).astype(bf16), "b2": jnp.zeros((1, 1), jnp.float32),
        "g": jnp.ones((1, H), jnp.float32), "b": jnp.zeros((1, H), jnp.float32),
    }
    return params


def dpbl_forward(data, params, heads, bt=None, print_attn=False):
    items = data["items"]
    mask = data["mask"]
    B, S = items.shape
    H = params["tok_emb"].shape[1]
    P = params["layers"][0]["pref"].shape[0]
    if bt is None:
        bt = _pick_batch_block(B, S, H, P)

    # Embedding (glue: gather + add), then bf16 activations for the MXU.
    x = (params["tok_emb"][items] + params["pos_emb"][None, :S, :]).astype(jnp.bfloat16)

    # Additive key-side mask computed once (hoisted out of all kernels).
    addmask_k = jnp.where(mask == 0, NEG_INF, 0.0).astype(jnp.float32).reshape(B, 1, S)

    attn_1 = attn_2 = None
    hidden_states = []
    for li, lp in enumerate(params["layers"]):
        # Attention maps are only taken from layer 0 and only written back when
        # the caller actually consumes them (print_attn=True).
        emit_attn = print_attn and li == 0
        if emit_attn:
            x, attn_1, attn_2, hid = run_layer(x, addmask_k, lp, heads, True, bt)
        else:
            x, hid = run_layer(x, addmask_k, lp, heads, False, bt)
        hidden_states.append(hid)
    hidden_states = jnp.stack(hidden_states)            # [n_layers, B, P, H] bf16

    if print_attn:
        return attn_1, attn_2

    out = run_head(x, addmask_k, params["head"], bt)     # [B, 1, H]
    return out[:, 0, :], hidden_states


# ----------------------------- main -----------------------------
if __name__ == "__main__":
    B, S, H, HEADS, PREF, N_LAYERS = 2, 8, 32, 4, 4, 2
    VOCAB = 50

    key = jax.random.PRNGKey(0)
    k_items, k_params = jax.random.split(key)

    items = jax.random.randint(k_items, (B, S), 0, VOCAB, dtype=jnp.int32)
    lengths = jnp.array([S, 5], dtype=jnp.int32)
    mask = (jnp.arange(S)[None, :] < lengths[:, None]).astype(jnp.int32)   # [B, S]

    params = init_dpbl_params(k_params, VOCAB, S, H, HEADS, PREF, N_LAYERS)
    data = {"items": items, "mask": mask}

    # Main path: scores / pooled output + per-layer hidden states.
    output, hidden_states = dpbl_forward(data, params, HEADS)
    jax.block_until_ready((output, hidden_states))
    assert output.shape == (B, H)
    assert hidden_states.shape == (N_LAYERS, B, PREF, H)
    assert bool(jnp.all(jnp.isfinite(output)))
    assert bool(jnp.all(jnp.isfinite(hidden_states.astype(jnp.float32))))

    # print_attn path (the only consumer of attention maps; exercises emit_attn=True).
    attn_1, attn_2 = dpbl_forward(data, params, HEADS, print_attn=True)
    jax.block_until_ready((attn_1, attn_2))
    assert attn_1.shape == (B, HEADS, S, S)
    assert attn_2.shape == (B, PREF, S)
    assert bool(jnp.all(jnp.isfinite(attn_1)))

    print("KERNEL_OK")
</pallas_src>

<mosaic_0001>
module attributes {stable_mosaic.version = 11 : i64} {
  func.func @_tiny_copy_kernel(%arg0: i32, %arg1: memref<8x128xf32, #tpu.memory_space<vmem>>, %arg2: memref<8x128xf32, #tpu.memory_space<vmem>>) attributes {dimension_semantics = [#tpu.dimension_semantics<arbitrary>], iteration_bounds = array<i64: 1>, scalar_prefetch = 0 : i64, scratch_operands = 0 : i64, tpu.core_type = #tpu.core_type<tc>, window_params = [{pipeline_mode = #tpu.pipeline_mode<synchronous>, transform_indices = @transform_0, window_bounds = array<i64: 8, 128>}, {pipeline_mode = #tpu.pipeline_mode<synchronous>, transform_indices = @transform_1, window_bounds = array<i64: 8, 128>}]} {
    %c0 = arith.constant 0 : index
    %c0_0 = arith.constant 0 : index
    %0 = vector.load %arg1[%c0, %c0_0] : memref<8x128xf32, #tpu.memory_space<vmem>>, vector<8x128xf32>
    %c0_1 = arith.constant 0 : index
    %c0_2 = arith.constant 0 : index
    %1 = vector.load %arg2[%c0_1, %c0_2] : memref<8x128xf32, #tpu.memory_space<vmem>>, vector<8x128xf32>
    tpu.vector_store %arg2[%c0_1, %c0_2], %0 {strides = array<i32>} : memref<8x128xf32, #tpu.memory_space<vmem>>, vector<8x128xf32>,
    return
  }
  func.func @transform_0(%arg0: i32) -> (i32, i32) {
    %c0_i32 = arith.constant 0 : i32
    %c0_i32_0 = arith.constant 0 : i32
    %c0_i32_1 = arith.constant 0 : i32
    return %c0_i32, %c0_i32_0 : i32, i32
  }
  func.func @transform_1(%arg0: i32) -> (i32, i32) {
    %c0_i32 = arith.constant 0 : i32
    %c0_i32_0 = arith.constant 0 : i32
    %c0_i32_1 = arith.constant 0 : i32
    return %c0_i32, %c0_i32_0 : i32, i32
  }
}

module attributes {stable_mosaic.version = 11 : i64} {
  func.func @layer_kernel(%arg0: i32, %arg1: memref<2x8x32xbf16, #tpu.memory_space<vmem>>, %arg2: memref<2x1x8xf32, #tpu.memory_space<vmem>>, %arg3: memref<32x96xbf16, #tpu.memory_space<vmem>>, %arg4: memref<1x96xf32, #tpu.memory_space<vmem>>, %arg5: memref<32x32xbf16, #tpu.memory_space<vmem>>, %arg6: memref<1x32xf32, #tpu.memory_space<vmem>>, %arg7: memref<32x32xbf16, #tpu.memory_space<vmem>>, %arg8: memref<1x32xf32, #tpu.memory_space<vmem>>, %arg9: memref<32x32xbf16, #tpu.memory_space<vmem>>, %arg10: memref<1x32xf32, #tpu.memory_space<vmem>>, %arg11: memref<1x32xf32, #tpu.memory_space<vmem>>, %arg12: memref<1x32xf32, #tpu.memory_space<vmem>>, %arg13: memref<1x32xf32, #tpu.memory_space<vmem>>, %arg14: memref<1x32xf32, #tpu.memory_space<vmem>>, %arg15: memref<4x32xbf16, #tpu.memory_space<vmem>>, %arg16: memref<2x8x32xbf16, #tpu.memory_space<vmem>>, %arg17: memref<2x4x32xbf16, #tpu.memory_space<vmem>>) attributes {dimension_semantics = [#tpu.dimension_semantics<parallel>], iteration_bounds = array<i64: 1>, scalar_prefetch = 0 : i64, scratch_operands = 0 : i64, tpu.core_type = #tpu.core_type<tc>, window_params = [{transform_indices = @transform_0, window_bounds = array<i64: 2, 8, 32>}, {transform_indices = @transform_1, window_bounds = array<i64: 2, 1, 8>}, {pipeline_mode = #tpu.pipeline_mode<synchronous>, transform_indices = @transform_2, window_bounds = array<i64: 32, 96>}, {pipeline_mode = #tpu.pipeline_mode<synchronous>, transform_indices = @transform_3, window_bounds = array<i64: 1, 96>}, {pipeline_mode = #tpu.pipeline_mode<synchronous>, transform_indices = @transform_4, window_bounds = array<i64: 32, 32>}, {pipeline_mode = #tpu.pipeline_mode<synchronous>, transform_indices = @transform_5, window_bounds = array<i64: 1, 32>}, {pipeline_mode = #tpu.pipeline_mode<synchronous>, transform_indices = @transform_6, window_bounds = array<i64: 32, 32>}, {pipeline_mode = #tpu.pipeline_mode<synchronous>, transform_indices = @transform_7, window_bounds = array<i64: 1, 32>}, {pipeline_mode = #tpu.pipeline_mode<synchronous>, transform_indices = @transform_8, window_bounds = array<i64: 32, 32>}, {pipeline_mode = #tpu.pipeline_mode<synchronous>, transform_indices = @transform_9, window_bounds = array<i64: 1, 32>}, {pipeline_mode = #tpu.pipeline_mode<synchronous>, transform_indices = @transform_10, window_bounds = array<i64: 1, 32>}, {pipeline_mode = #tpu.pipeline_mode<synchronous>, transform_indices = @transform_11, window_bounds = array<i64: 1, 32>}, {pipeline_mode = #tpu.pipeline_mode<synchronous>, transform_indices = @transform_12, window_bounds = array<i64: 1, 32>}, {pipeline_mode = #tpu.pipeline_mode<synchronous>, transform_indices = @transform_13, window_bounds = array<i64: 1, 32>}, {pipeline_mode = #tpu.pipeline_mode<synchronous>, transform_indices = @transform_14, window_bounds = array<i64: 4, 32>}, {transform_indices = @transform_15, window_bounds = array<i64: 2, 8, 32>}, {transform_indices = @transform_16, window_bounds = array<i64: 2, 4, 32>}]} {
    %c0 = arith.constant 0 : index
    %c0_0 = arith.constant 0 : index
    %c0_1 = arith.constant 0 : index
    %0 = vector.load %arg2[%c0, %c0_0, %c0_1] : memref<2x1x8xf32, #tpu.memory_space<vmem>>, vector<2x1x8xf32>
    %c0_2 = arith.constant 0 : index
    %c0_3 = arith.constant 0 : index
    %c0_4 = arith.constant 0 : index
    %1 = vector.load %arg1[%c0_2, %c0_3, %c0_4] : memref<2x8x32xbf16, #tpu.memory_space<vmem>>, vector<2x8x32xbf16>
    %2 = vector.shape_cast %1 : vector<2x8x32xbf16> to vector<16x32xbf16>
    %c0_5 = arith.constant 0 : index
    %c0_6 = arith.constant 0 : index
    %3 = vector.load %arg3[%c0_5, %c0_6] : memref<32x96xbf16, #tpu.memory_space<vmem>>, vector<32x96xbf16>
    %cst = arith.constant dense<0.000000e+00> : vector<16x96xf32>
    %4 = tpu.matmul %2, %3, %cst {dimension_numbers = #tpu.dot_dimension_numbers<[1], [0], [0], [1], [0, 0, 1, 1], [], []>} : vector<16x32xbf16>, vector<32x96xbf16>, vector<16x96xf32> -> vector<16x96xf32>
    %c0_7 = arith.constant 0 : index
    %c0_8 = arith.constant 0 : index
    %5 = vector.load %arg4[%c0_7, %c0_8] : memref<1x96xf32, #tpu.memory_space<vmem>>, vector<1x96xf32>
    %6 = vector.broadcast %5 : vector<1x96xf32> to vector<16x96xf32>
    %7 = arith.addf %4, %6 : vector<16x96xf32>
    %8 = arith.truncf %7 : vector<16x96xf32> to vector<16x96xbf16>
    %9 = vector.extract_strided_slice %8 {offsets = [0, 0], sizes = [16, 8], strides = [1, 1]} : vector<16x96xbf16> to vector<16x8xbf16>
    %10 = vector.shape_cast %9 : vector<16x8xbf16> to vector<2x8x8xbf16>
    %11 = vector.extract_strided_slice %8 {offsets = [0, 32], sizes = [16, 8], strides = [1, 1]} : vector<16x96xbf16> to vector<16x8xbf16>
    %12 = vector.shape_cast %11 : vector<16x8xbf16> to vector<2x8x8xbf16>
    %13 = vector.extract_strided_slice %8 {offsets = [0, 64], sizes = [16, 8], strides = [1, 1]} : vector<16x96xbf16> to vector<16x8xbf16>
    %14 = vector.shape_cast %13 : vector<16x8xbf16> to vector<2x8x8xbf16>
    "tpu.trace_start"() <{level = 10 : i32, message = "bqd,bkd->bqk"}> : () -> ()
    %cst_9 = arith.constant dense<0.000000e+00> : vector<2x8x8xf32>
    %15 = tpu.matmul %10, %12, %cst_9 {dimension_numbers = #tpu.dot_dimension_numbers<[2], [2], [1], [1], [0, 0, 0, 1, 1, 1], [0], [0]>} : vector<2x8x8xbf16>, vector<2x8x8xbf16>, vector<2x8x8xf32> -> vector<2x8x8xf32>
    "tpu.trace_stop"() : () -> ()
    %16 = vector.broadcast %0 : vector<2x1x8xf32> to vector<2x8x8xf32>
    %17 = arith.addf %15, %16 : vector<2x8x8xf32>
    %cst_10 = arith.constant dense<0xFF800000> : vector<2x8xf32>
    %18 = vector.multi_reduction <maximumf>, %17, %cst_10 [2] : vector<2x8x8xf32> to vector<2x8xf32>
    %19 = vector.shape_cast %18 : vector<2x8xf32> to vector<2x8x1xf32>
    %20 = vector.broadcast %19 : vector<2x8x1xf32> to vector<2x8x8xf32>
    %21 = arith.subf %17, %20 : vector<2x8x8xf32>
    %22 = math.exp %21 : vector<2x8x8xf32>
    %cst_11 = arith.constant dense<0.000000e+00> : vector<2x8xf32>
    %23 = vector.multi_reduction <add>, %22, %cst_11 [2] : vector<2x8x8xf32> to vector<2x8xf32>
    %24 = vector.shape_cast %23 : vector<2x8xf32> to vector<2x8x1xf32>
    %25 = tpu.reciprocal %24 {approx = true} : vector<2x8x1xf32> -> vector<2x8x1xf32>
    %26 = vector.broadcast %25 : vector<2x8x1xf32> to vector<2x8x8xf32>
    %27 = arith.mulf %22, %26 : vector<2x8x8xf32>
    %28 = arith.truncf %27 : vector<2x8x8xf32> to vector<2x8x8xbf16>
    "tpu.trace_start"() <{level = 10 : i32, message = "bqk,bkd->bqd"}> : () -> ()
    %cst_12 = arith.constant dense<0.000000e+00> : vector<2x8x8xf32>
    %29 = tpu.matmul %28, %14, %cst_12 {dimension_numbers = #tpu.dot_dimension_numbers<[2], [1], [1], [2], [0, 0, 0, 1, 1, 2], [0], [0]>} : vector<2x8x8xbf16>, vector<2x8x8xbf16>, vector<2x8x8xf32> -> vector<2x8x8xf32>
    "tpu.trace_stop"() : () -> ()
    %30 = vector.shape_cast %29 : vector<2x8x8xf32> to vector<16x8xf32>
    %31 = vector.extract_strided_slice %8 {offsets = [0, 8], sizes = [16, 8], strides = [1, 1]} : vector<16x96xbf16> to vector<16x8xbf16>
    %32 = vector.shape_cast %31 : vector<16x8xbf16> to vector<2x8x8xbf16>
    %33 = vector.extract_strided_slice %8 {offsets = [0, 40], sizes = [16, 8], strides = [1, 1]} : vector<16x96xbf16> to vector<16x8xbf16>
    %34 = vector.shape_cast %33 : vector<16x8xbf16> to vector<2x8x8xbf16>
    %35 = vector.extract_strided_slice %8 {offsets = [0, 72], sizes = [16, 8], strides = [1, 1]} : vector<16x96xbf16> to vector<16x8xbf16>
    %36 = vector.shape_cast %35 : vector<16x8xbf16> to vector<2x8x8xbf16>
    "tpu.trace_start"() <{level = 10 : i32, message = "bqd,bkd->bqk"}> : () -> ()
    %cst_13 = arith.constant dense<0.000000e+00> : vector<2x8x8xf32>
    %37 = tpu.matmul %32, %34, %cst_13 {dimension_numbers = #tpu.dot_dimension_numbers<[2], [2], [1], [1], [0, 0, 0, 1, 1, 1], [0], [0]>} : vector<2x8x8xbf16>, vector<2x8x8xbf16>, vector<2x8x8xf32> -> vector<2x8x8xf32>
    "tpu.trace_stop"() : () -> ()
    %38 = vector.broadcast %0 : vector<2x1x8xf32> to vector<2x8x8xf32>
    %39 = arith.addf %37, %38 : vector<2x8x8xf32>
    %cst_14 = arith.constant dense<0xFF800000> : vector<2x8xf32>
    %40 = vector.multi_reduction <maximumf>, %39, %cst_14 [2] : vector<2x8x8xf32> to vector<2x8xf32>
    %41 = vector.shape_cast %40 : vector<2x8xf32> to vector<2x8x1xf32>
    %42 = vector.broadcast %41 : vector<2x8x1xf32> to vector<2x8x8xf32>
    %43 = arith.subf %39, %42 : vector<2x8x8xf32>
    %44 = math.exp %43 : vector<2x8x8xf32>
    %cst_15 = arith.constant dense<0.000000e+00> : vector<2x8xf32>
    %45 = vector.multi_reduction <add>, %44, %cst_15 [2] : vector<2x8x8xf32> to vector<2x8xf32>
    %46 = vector.shape_cast %45 : vector<2x8xf32> to vector<2x8x1xf32>
    %47 = tpu.reciprocal %46 {approx = true} : vector<2x8x1xf32> -> vector<2x8x1xf32>
    %48 = vector.broadcast %47 : vector<2x8x1xf32> to vector<2x8x8xf32>
    %49 = arith.mulf %44, %48 : vector<2x8x8xf32>
    %50 = arith.truncf %49 : vector<2x8x8xf32> to vector<2x8x8xbf16>
    "tpu.trace_start"() <{level = 10 : i32, message = "bqk,bkd->bqd"}> : () -> ()
    %cst_16 = arith.constant dense<0.000000e+00> : vector<2x8x8xf32>
    %51 = tpu.matmul %50, %36, %cst_16 {dimension_numbers = #tpu.dot_dimension_numbers<[2], [1], [1], [2], [0, 0, 0, 1, 1, 2], [0], [0]>} : vector<2x8x8xbf16>, vector<2x8x8xbf16>, vector<2x8x8xf32> -> vector<2x8x8xf32>
    "tpu.trace_stop"() : () -> ()
    %52 = vector.shape_cast %51 : vector<2x8x8xf32> to vector<16x8xf32>
    %53 = vector.extract_strided_slice %8 {offsets = [0, 16], sizes = [16, 8], strides = [1, 1]} : vector<16x96xbf16> to vector<16x8xbf16>
    %54 = vector.shape_cast %53 : vector<16x8xbf16> to vector<2x8x8xbf16>
    %55 = vector.extract_strided_slice %8 {offsets = [0, 48], sizes = [16, 8], strides = [1, 1]} : vector<16x96xbf16> to vector<16x8xbf16>
    %56 = vector.shape_cast %55 : vector<16x8xbf16> to vector<2x8x8xbf16>
    %57 = vector.extract_strided_slice %8 {offsets = [0, 80], sizes = [16, 8], strides = [1, 1]} : vector<16x96xbf16> to vector<16x8xbf16>
    %58 = vector.shape_cast %57 : vector<16x8xbf16> to vector<2x8x8xbf16>
    "tpu.trace_start"() <{level = 10 : i32, message = "bqd,bkd->bqk"}> : () -> ()
    %cst_17 = arith.constant dense<0.000000e+00> : vector<2x8x8xf32>
    %59 = tpu.matmul %54, %56, %cst_17 {dimension_numbers = #tpu.dot_dimension_numbers<[2], [2], [1], [1], [0, 0, 0, 1, 1, 1], [0], [0]>} : vector<2x8x8xbf16>, vector<2x8x8xbf16>, vector<2x8x8xf32> -> vector<2x8x8xf32>
    "tpu.trace_stop"() : () -> ()
    %60 = vector.broadcast %0 : vector<2x1x8xf32> to vector<2x8x8xf32>
    %61 = arith.addf %59, %60 : vector<2x8x8xf32>
    %cst_18 = arith.constant dense<0xFF800000> : vector<2x8xf32>
    %62 = vector.multi_reduction <maximumf>, %61, %cst_18 [2] : vector<2x8x8xf32> to vector<2x8xf32>
    %63 = vector.shape_cast %62 : vector<2x8xf32> to vector<2x8x1xf32>
    %64 = vector.broadcast %63 : vector<2x8x1xf32> to vector<2x8x8xf32>
    %65 = arith.subf %61, %64 : vector<2x8x8xf32>
    %66 = math.exp %65 : vector<2x8x8xf32>
    %cst_19 = arith.constant dense<0.000000e+00> : vector<2x8xf32>
    %67 = vector.multi_reduction <add>, %66, %cst_19 [2] : vector<2x8x8xf32> to vector<2x8xf32>
    %68 = vector.shape_cast %67 : vector<2x8xf32> to vector<2x8x1xf32>
    %69 = tpu.reciprocal %68 {approx = true} : vector<2x8x1xf32> -> vector<2x8x1xf32>
    %70 = vector.broadcast %69 : vector<2x8x1xf32> to vector<2x8x8xf32>
    %71 = arith.mulf %66, %70 : vector<2x8x8xf32>
    %72 = arith.truncf %71 : vector<2x8x8xf32> to vector<2x8x8xbf16>
    "tpu.trace_start"() <{level = 10 : i32, message = "bqk,bkd->bqd"}> : () -> ()
    %cst_20 = arith.constant dense<0.000000e+00> : vector<2x8x8xf32>
    %73 = tpu.matmul %72, %58, %cst_20 {dimension_numbers = #tpu.dot_dimension_numbers<[2], [1], [1], [2], [0, 0, 0, 1, 1, 2], [0], [0]>} : vector<2x8x8xbf16>, vector<2x8x8xbf16>, vector<2x8x8xf32> -> vector<2x8x8xf32>
    "tpu.trace_stop"() : () -> ()
    %74 = vector.shape_cast %73 : vector<2x8x8xf32> to vector<16x8xf32>
    %75 = vector.extract_strided_slice %8 {offsets = [0, 24], sizes = [16, 8], strides = [1, 1]} : vector<16x96xbf16> to vector<16x8xbf16>
    %76 = vector.shape_cast %75 : vector<16x8xbf16> to vector<2x8x8xbf16>
    %77 = vector.extract_strided_slice %8 {offsets = [0, 56], sizes = [16, 8], strides = [1, 1]} : vector<16x96xbf16> to vector<16x8xbf16>
    %78 = vector.shape_cast %77 : vector<16x8xbf16> to vector<2x8x8xbf16>
    %79 = vector.extract_strided_slice %8 {offsets = [0, 88], sizes = [16, 8], strides = [1, 1]} : vector<16x96xbf16> to vector<16x8xbf16>
    %80 = vector.shape_cast %79 : vector<16x8xbf16> to vector<2x8x8xbf16>
    "tpu.trace_start"() <{level = 10 : i32, message = "bqd,bkd->bqk"}> : () -> ()
    %cst_21 = arith.constant dense<0.000000e+00> : vector<2x8x8xf32>
    %81 = tpu.matmul %76, %78, %cst_21 {dimension_numbers = #tpu.dot_dimension_numbers<[2], [2], [1], [1], [0, 0, 0, 1, 1, 1], [0], [0]>} : vector<2x8x8xbf16>, vector<2x8x8xbf16>, vector<2x8x8xf32> -> vector<2x8x8xf32>
    "tpu.trace_stop"() : () -> ()
    %82 = vector.broadcast %0 : vector<2x1x8xf32> to vector<2x8x8xf32>
    %83 = arith.addf %81, %82 : vector<2x8x8xf32>
    %cst_22 = arith.constant dense<0xFF800000> : vector<2x8xf32>
    %84 = vector.multi_reduction <maximumf>, %83, %cst_22 [2] : vector<2x8x8xf32> to vector<2x8xf32>
    %85 = vector.shape_cast %84 : vector<2x8xf32> to vector<2x8x1xf32>
    %86 = vector.broadcast %85 : vector<2x8x1xf32> to vector<2x8x8xf32>
    %87 = arith.subf %83, %86 : vector<2x8x8xf32>
    %88 = math.exp %87 : vector<2x8x8xf32>
    %cst_23 = arith.constant dense<0.000000e+00> : vector<2x8xf32>
    %89 = vector.multi_reduction <add>, %88, %cst_23 [2] : vector<2x8x8xf32> to vector<2x8xf32>
    %90 = vector.shape_cast %89 : vector<2x8xf32> to vector<2x8x1xf32>
    %91 = tpu.reciprocal %90 {approx = true} : vector<2x8x1xf32> -> vector<2x8x1xf32>
    %92 = vector.broadcast %91 : vector<2x8x1xf32> to vector<2x8x8xf32>
    %93 = arith.mulf %88, %92 : vector<2x8x8xf32>
    %94 = arith.truncf %93 : vector<2x8x8xf32> to vector<2x8x8xbf16>
    "tpu.trace_start"() <{level = 10 : i32, message = "bqk,bkd->bqd"}> : () -> ()
    %cst_24 = arith.constant dense<0.000000e+00> : vector<2x8x8xf32>
    %95 = tpu.matmul %94, %80, %cst_24 {dimension_numbers = #tpu.dot_dimension_numbers<[2], [1], [1], [2], [0, 0, 0, 1, 1, 2], [0], [0]>} : vector<2x8x8xbf16>, vector<2x8x8xbf16>, vector<2x8x8xf32> -> vector<2x8x8xf32>
    "tpu.trace_stop"() : () -> ()
    %96 = vector.shape_cast %95 : vector<2x8x8xf32> to vector<16x8xf32>
    %97 = tpu.concatenate %30, %52, %74, %96 in 1 : vector<16x8xf32>, vector<16x8xf32>, vector<16x8xf32>, vector<16x8xf32> -> vector<16x32xf32>
    %98 = arith.truncf %97 : vector<16x32xf32> to vector<16x32xbf16>
    %c0_25 = arith.constant 0 : index
    %c0_26 = arith.constant 0 : index
    %99 = vector.load %arg5[%c0_25, %c0_26] : memref<32x32xbf16, #tpu.memory_space<vmem>>, vector<32x32xbf16>
    %cst_27 = arith.constant dense<0.000000e+00> : vector<16x32xf32>
    %100 = tpu.matmul %98, %99, %cst_27 {dimension_numbers = #tpu.dot_dimension_numbers<[1], [0], [0], [1], [0, 0, 1, 1], [], []>} : vector<16x32xbf16>, vector<32x32xbf16>, vector<16x32xf32> -> vector<16x32xf32>
    %c0_28 = arith.constant 0 : index
    %c0_29 = arith.constant 0 : index
    %101 = vector.load %arg6[%c0_28, %c0_29] : memref<1x32xf32, #tpu.memory_space<vmem>>, vector<1x32xf32>
    %102 = vector.broadcast %101 : vector<1x32xf32> to vector<16x32xf32>
    %103 = arith.addf %100, %102 : vector<16x32xf32>
    %104 = arith.extf %2 : vector<16x32xbf16> to vector<16x32xf32>
    %105 = arith.addf %104, %103 : vector<16x32xf32>
    %c0_30 = arith.constant 0 : index
    %c0_31 = arith.constant 0 : index
    %106 = vector.load %arg11[%c0_30, %c0_31] : memref<1x32xf32, #tpu.memory_space<vmem>>, vector<1x32xf32>
    %c0_32 = arith.constant 0 : index
    %c0_33 = arith.constant 0 : index
    %107 = vector.load %arg12[%c0_32, %c0_33] : memref<1x32xf32, #tpu.memory_space<vmem>>, vector<1x32xf32>
    %cst_34 = arith.constant dense<0.000000e+00> : vector<16xf32>
    %108 = vector.multi_reduction <add>, %105, %cst_34 [1] : vector<16x32xf32> to vector<16xf32>
    %109 = vector.shape_cast %108 : vector<16xf32> to vector<16x1xf32>
    %cst_35 = arith.constant 3.200000e+01 : f32
    %110 = vector.broadcast %cst_35 : f32 to vector<16x1xf32>
    %111 = arith.divf %109, %110 : vector<16x1xf32>
    %112 = vector.broadcast %111 : vector<16x1xf32> to vector<16x32xf32>
    %113 = arith.subf %105, %112 : vector<16x32xf32>
    %114 = vector.broadcast %111 : vector<16x1xf32> to vector<16x32xf32>
    %115 = arith.subf %105, %114 : vector<16x32xf32>
    %116 = arith.mulf %113, %115 : vector<16x32xf32>
    %cst_36 = arith.constant dense<0.000000e+00> : vector<16xf32>
    %117 = vector.multi_reduction <add>, %116, %cst_36 [1] : vector<16x32xf32> to vector<16xf32>
    %118 = vector.shape_cast %117 : vector<16xf32> to vector<16x1xf32>
    %cst_37 = arith.constant 3.200000e+01 : f32
    %119 = vector.broadcast %cst_37 : f32 to vector<16x1xf32>
    %120 = arith.divf %118, %119 : vector<16x1xf32>
    %121 = vector.broadcast %111 : vector<16x1xf32> to vector<16x32xf32>
    %122 = arith.subf %105, %121 : vector<16x32xf32>
    %cst_38 = arith.constant 9.99999997E-7 : f32
    %123 = vector.broadcast %cst_38 : f32 to vector<16x1xf32>
    %124 = arith.addf %120, %123 : vector<16x1xf32>
    %125 = math.rsqrt %124 : vector<16x1xf32>
    %126 = vector.broadcast %125 : vector<16x1xf32> to vector<16x32xf32>
    %127 = arith.mulf %122, %126 : vector<16x32xf32>
    %128 = vector.broadcast %106 : vector<1x32xf32> to vector<16x32xf32>
    %129 = arith.mulf %127, %128 : vector<16x32xf32>
    %130 = vector.broadcast %107 : vector<1x32xf32> to vector<16x32xf32>
    %131 = arith.addf %129, %130 : vector<16x32xf32>
    %132 = arith.truncf %131 : vector<16x32xf32> to vector<16x32xbf16>
    %c0_39 = arith.constant 0 : index
    %c0_40 = arith.constant 0 : index
    %133 = vector.load %arg7[%c0_39, %c0_40] : memref<32x32xbf16, #tpu.memory_space<vmem>>, vector<32x32xbf16>
    %cst_41 = arith.constant dense<0.000000e+00> : vector<16x32xf32>
    %134 = tpu.matmul %132, %133, %cst_41 {dimension_numbers = #tpu.dot_dimension_numbers<[1], [0], [0], [1], [0, 0, 1, 1], [], []>} : vector<16x32xbf16>, vector<32x32xbf16>, vector<16x32xf32> -> vector<16x32xf32>
    %c0_42 = arith.constant 0 : index
    %c0_43 = arith.constant 0 : index
    %135 = vector.load %arg8[%c0_42, %c0_43] : memref<1x32xf32, #tpu.memory_space<vmem>>, vector<1x32xf32>
    %136 = vector.broadcast %135 : vector<1x32xf32> to vector<16x32xf32>
    %137 = arith.addf %134, %136 : vector<16x32xf32>
    %cst_44 = arith.constant 5.000000e-01 : f32
    %138 = vector.broadcast %cst_44 : f32 to vector<16x32xf32>
    %139 = arith.mulf %138, %137 : vector<16x32xf32>
    %cst_45 = arith.constant 4.471500e-02 : f32
    %140 = vector.broadcast %cst_45 : f32 to vector<16x32xf32>
    %141 = arith.mulf %140, %137 : vector<16x32xf32>
    %142 = arith.mulf %141, %137 : vector<16x32xf32>
    %143 = arith.mulf %142, %137 : vector<16x32xf32>
    %144 = arith.addf %137, %143 : vector<16x32xf32>
    %cst_46 = arith.constant 0.797884583 : f32
    %145 = vector.broadcast %cst_46 : f32 to vector<16x32xf32>
    %146 = arith.mulf %145, %144 : vector<16x32xf32>
    %147 = math.tanh %146 : vector<16x32xf32>
    %cst_47 = arith.constant 1.000000e+00 : f32
    %148 = vector.broadcast %cst_47 : f32 to vector<16x32xf32>
    %149 = arith.addf %148, %147 : vector<16x32xf32>
    %150 = arith.mulf %139, %149 : vector<16x32xf32>
    %151 = arith.truncf %150 : vector<16x32xf32> to vector<16x32xbf16>
    %c0_48 = arith.constant 0 : index
    %c0_49 = arith.constant 0 : index
    %152 = vector.load %arg9[%c0_48, %c0_49] : memref<32x32xbf16, #tpu.memory_space<vmem>>, vector<32x32xbf16>
    %cst_50 = arith.constant dense<0.000000e+00> : vector<16x32xf32>
    %153 = tpu.matmul %151, %152, %cst_50 {dimension_numbers = #tpu.dot_dimension_numbers<[1], [0], [0], [1], [0, 0, 1, 1], [], []>} : vector<16x32xbf16>, vector<32x32xbf16>, vector<16x32xf32> -> vector<16x32xf32>
    %c0_51 = arith.constant 0 : index
    %c0_52 = arith.constant 0 : index
    %154 = vector.load %arg10[%c0_51, %c0_52] : memref<1x32xf32, #tpu.memory_space<vmem>>, vector<1x32xf32>
    %155 = vector.broadcast %154 : vector<1x32xf32> to vector<16x32xf32>
    %156 = arith.addf %153, %155 : vector<16x32xf32>
    %157 = arith.addf %131, %156 : vector<16x32xf32>
    %c0_53 = arith.constant 0 : index
    %c0_54 = arith.constant 0 : index
    %158 = vector.load %arg13[%c0_53, %c0_54] : memref<1x32xf32, #tpu.memory_space<vmem>>, vector<1x32xf32>
    %c0_55 = arith.constant 0 : index
    %c0_56 = arith.constant 0 : index
    %159 = vector.load %arg14[%c0_55, %c0_56] : memref<1x32xf32, #tpu.memory_space<vmem>>, vector<1x32xf32>
    %cst_57 = arith.constant dense<0.000000e+00> : vector<16xf32>
    %160 = vector.multi_reduction <add>, %157, %cst_57 [1] : vector<16x32xf32> to vector<16xf32>
    %161 = vector.shape_cast %160 : vector<16xf32> to vector<16x1xf32>
    %cst_58 = arith.constant 3.200000e+01 : f32
    %162 = vector.broadcast %cst_58 : f32 to vector<16x1xf32>
    %163 = arith.divf %161, %162 : vector<16x1xf32>
    %164 = vector.broadcast %163 : vector<16x1xf32> to vector<16x32xf32>
    %165 = arith.subf %157, %164 : vector<16x32xf32>
    %166 = vector.broadcast %163 : vector<16x1xf32> to vector<16x32xf32>
    %167 = arith.subf %157, %166 : vector<16x32xf32>
    %168 = arith.mulf %165, %167 : vector<16x32xf32>
    %cst_59 = arith.constant dense<0.000000e+00> : vector<16xf32>
    %169 = vector.multi_reduction <add>, %168, %cst_59 [1] : vector<16x32xf32> to vector<16xf32>
    %170 = vector.shape_cast %169 : vector<16xf32> to vector<16x1xf32>
    %cst_60 = arith.constant 3.200000e+01 : f32
    %171 = vector.broadcast %cst_60 : f32 to vector<16x1xf32>
    %172 = arith.divf %170, %171 : vector<16x1xf32>
    %173 = vector.broadcast %163 : vector<16x1xf32> to vector<16x32xf32>
    %174 = arith.subf %157, %173 : vector<16x32xf32>
    %cst_61 = arith.constant 9.99999997E-7 : f32
    %175 = vector.broadcast %cst_61 : f32 to vector<16x1xf32>
    %176 = arith.addf %172, %175 : vector<16x1xf32>
    %177 = math.rsqrt %176 : vector<16x1xf32>
    %178 = vector.broadcast %177 : vector<16x1xf32> to vector<16x32xf32>
    %179 = arith.mulf %174, %178 : vector<16x32xf32>
    %180 = vector.broadcast %158 : vector<1x32xf32> to vector<16x32xf32>
    %181 = arith.mulf %179, %180 : vector<16x32xf32>
    %182 = vector.broadcast %159 : vector<1x32xf32> to vector<16x32xf32>
    %183 = arith.addf %181, %182 : vector<16x32xf32>
    %184 = arith.truncf %183 : vector<16x32xf32> to vector<16x32xbf16>
    %185 = vector.shape_cast %184 : vector<16x32xbf16> to vector<2x8x32xbf16>
    %c0_62 = arith.constant 0 : index
    %c0_63 = arith.constant 0 : index
    %c0_64 = arith.constant 0 : index
    %186 = vector.load %arg16[%c0_62, %c0_63, %c0_64] : memref<2x8x32xbf16, #tpu.memory_space<vmem>>, vector<2x8x32xbf16>
    tpu.vector_store %arg16[%c0_62, %c0_63, %c0_64], %185 {strides = array<i32>} : memref<2x8x32xbf16, #tpu.memory_space<vmem>>, vector<2x8x32xbf16>,
    %c0_65 = arith.constant 0 : index
    %c0_66 = arith.constant 0 : index
    %187 = vector.load %arg15[%c0_65, %c0_66] : memref<4x32xbf16, #tpu.memory_space<vmem>>, vector<4x32xbf16>
    %188 = vector.shape_cast %187 : vector<4x32xbf16> to vector<1x4x32xbf16>
    %189 = vector.broadcast %188 : vector<1x4x32xbf16> to vector<2x4x32xbf16>
    "tpu.trace_start"() <{level = 10 : i32, message = "bph,bsh->bps"}> : () -> ()
    %cst_67 = arith.constant dense<0.000000e+00> : vector<2x4x8xf32>
    %190 = tpu.matmul %189, %185, %cst_67 {dimension_numbers = #tpu.dot_dimension_numbers<[2], [2], [1], [1], [0, 0, 0, 1, 1, 1], [0], [0]>} : vector<2x4x32xbf16>, vector<2x8x32xbf16>, vector<2x4x8xf32> -> vector<2x4x8xf32>
    "tpu.trace_stop"() : () -> ()
    %191 = vector.broadcast %0 : vector<2x1x8xf32> to vector<2x4x8xf32>
    %192 = arith.addf %190, %191 : vector<2x4x8xf32>
    %cst_68 = arith.constant dense<0xFF800000> : vector<2x4xf32>
    %193 = vector.multi_reduction <maximumf>, %192, %cst_68 [2] : vector<2x4x8xf32> to vector<2x4xf32>
    %194 = vector.shape_cast %193 : vector<2x4xf32> to vector<2x4x1xf32>
    %195 = vector.broadcast %194 : vector<2x4x1xf32> to vector<2x4x8xf32>
    %196 = arith.subf %192, %195 : vector<2x4x8xf32>
    %197 = math.exp %196 : vector<2x4x8xf32>
    %cst_69 = arith.constant dense<0.000000e+00> : vector<2x4xf32>
    %198 = vector.multi_reduction <add>, %197, %cst_69 [2] : vector<2x4x8xf32> to vector<2x4xf32>
    %199 = vector.shape_cast %198 : vector<2x4xf32> to vector<2x4x1xf32>
    %200 = tpu.reciprocal %199 {approx = true} : vector<2x4x1xf32> -> vector<2x4x1xf32>
    %201 = vector.broadcast %200 : vector<2x4x1xf32> to vector<2x4x8xf32>
    %202 = arith.mulf %197, %201 : vector<2x4x8xf32>
    %203 = arith.truncf %202 : vector<2x4x8xf32> to vector<2x4x8xbf16>
    "tpu.trace_start"() <{level = 10 : i32, message = "bps,bsh->bph"}> : () -> ()
    %cst_70 = arith.constant dense<0.000000e+00> : vector<2x4x32xf32>
    %204 = tpu.matmul %203, %185, %cst_70 {dimension_numbers = #tpu.dot_dimension_numbers<[2], [1], [1], [2], [0, 0, 0, 1, 1, 2], [0], [0]>} : vector<2x4x8xbf16>, vector<2x8x32xbf16>, vector<2x4x32xf32> -> vector<2x4x32xf32>
    "tpu.trace_stop"() : () -> ()
    %205 = arith.truncf %204 : vector<2x4x32xf32> to vector<2x4x32xbf16>
    %c0_71 = arith.constant 0 : index
    %c0_72 = arith.constant 0 : index
    %c0_73 = arith.constant 0 : index
    %206 = vector.load %arg17[%c0_71, %c0_72, %c0_73] : memref<2x4x32xbf16, #tpu.memory_space<vmem>>, vector<2x4x32xbf16>
    tpu.vector_store %arg17[%c0_71, %c0_72, %c0_73], %205 {strides = array<i32>} : memref<2x4x32xbf16, #tpu.memory_space<vmem>>, vector<2x4x32xbf16>,
    return
  }
  func.func @transform_0(%arg0: i32) -> (i32, i32, i32) {
    %c0_i32 = arith.constant 0 : i32
    %c0_i32_0 = arith.constant 0 : i32
    %c0_i32_1 = arith.constant 0 : i32
    return %arg0, %c0_i32, %c0_i32_0 : i32, i32, i32
  }
  func.func @transform_1(%arg0: i32) -> (i32, i32, i32) {
    %c0_i32 = arith.constant 0 : i32
    %c0_i32_0 = arith.constant 0 : i32
    %c0_i32_1 = arith.constant 0 : i32
    return %arg0, %c0_i32, %c0_i32_0 : i32, i32, i32
  }
  func.func @transform_2(%arg0: i32) -> (i32, i32) {
    %c0_i32 = arith.constant 0 : i32
    %c0_i32_0 = arith.constant 0 : i32
    %c0_i32_1 = arith.constant 0 : i32
    return %c0_i32, %c0_i32_0 : i32, i32
  }
  func.func @transform_3(%arg0: i32) -> (i32, i32) {
    %c0_i32 = arith.constant 0 : i32
    %c0_i32_0 = arith.constant 0 : i32
    %c0_i32_1 = arith.constant 0 : i32
    return %c0_i32, %c0_i32_0 : i32, i32
  }
  func.func @transform_4(%arg0: i32) -> (i32, i32) {
    %c0_i32 = arith.constant 0 : i32
    %c0_i32_0 = arith.constant 0 : i32
    %c0_i32_1 = arith.constant 0 : i32
    return %c0_i32, %c0_i32_0 : i32, i32
  }
  func.func @transform_5(%arg0: i32) -> (i32, i32) {
    %c0_i32 = arith.constant 0 : i32
    %c0_i32_0 = arith.constant 0 : i32
    %c0_i32_1 = arith.constant 0 : i32
    return %c0_i32, %c0_i32_0 : i32, i32
  }
  func.func @transform_6(%arg0: i32) -> (i32, i32) {
    %c0_i32 = arith.constant 0 : i32
    %c0_i32_0 = arith.constant 0 : i32
    %c0_i32_1 = arith.constant 0 : i32
    return %c0_i32, %c0_i32_0 : i32, i32
  }
  func.func @transform_7(%arg0: i32) -> (i32, i32) {
    %c0_i32 = arith.constant 0 : i32
    %c0_i32_0 = arith.constant 0 : i32
    %c0_i32_1 = arith.constant 0 : i32
    return %c0_i32, %c0_i32_0 : i32, i32
  }
  func.func @transform_8(%arg0: i32) -> (i32, i32) {
    %c0_i32 = arith.constant 0 : i32
    %c0_i32_0 = arith.constant 0 : i32
    %c0_i32_1 = arith.constant 0 : i32
    return %c0_i32, %c0_i32_0 : i32, i32
  }
  func.func @transform_9(%arg0: i32) -> (i32, i32) {
    %c0_i32 = arith.constant 0 : i32
    %c0_i32_0 = arith.constant 0 : i32
    %c0_i32_1 = arith.constant 0 : i32
    return %c0_i32, %c0_i32_0 : i32, i32
  }
  func.func @transform_10(%arg0: i32) -> (i32, i32) {
    %c0_i32 = arith.constant 0 : i32
    %c0_i32_0 = arith.constant 0 : i32
    %c0_i32_1 = arith.constant 0 : i32
    return %c0_i32, %c0_i32_0 : i32, i32
  }
  func.func @transform_11(%arg0: i32) -> (i32, i32) {
    %c0_i32 = arith.constant 0 : i32
    %c0_i32_0 = arith.constant 0 : i32
    %c0_i32_1 = arith.constant 0 : i32
    return %c0_i32, %c0_i32_0 : i32, i32
  }
  func.func @transform_12(%arg0: i32) -> (i32, i32) {
    %c0_i32 = arith.constant 0 : i32
    %c0_i32_0 = arith.constant 0 : i32
    %c0_i32_1 = arith.constant 0 : i32
    return %c0_i32, %c0_i32_0 : i32, i32
  }
  func.func @transform_13(%arg0: i32) -> (i32, i32) {
    %c0_i32 = arith.constant 0 : i32
    %c0_i32_0 = arith.constant 0 : i32
    %c0_i32_1 = arith.constant 0 : i32
    return %c0_i32, %c0_i32_0 : i32, i32
  }
  func.func @transform_14(%arg0: i32) -> (i32, i32) {
    %c0_i32 = arith.constant 0 : i32
    %c0_i32_0 = arith.constant 0 : i32
    %c0_i32_1 = arith.constant 0 : i32
    return %c0_i32, %c0_i32_0 : i32, i32
  }
  func.func @transform_15(%arg0: i32) -> (i32, i32, i32) {
    %c0_i32 = arith.constant 0 : i32
    %c0_i32_0 = arith.constant 0 : i32
    %c0_i32_1 = arith.constant 0 : i32
    return %arg0, %c0_i32, %c0_i32_0 : i32, i32, i32
  }
  func.func @transform_16(%arg0: i32) -> (i32, i32, i32) {
    %c0_i32 = arith.constant 0 : i32
    %c0_i32_0 = arith.constant 0 : i32
    %c0_i32_1 = arith.constant 0 : i32
    return %arg0, %c0_i32, %c0_i32_0 : i32, i32, i32
  }
}

</mosaic_0001>

<llo_original>
// kernel: tpu_custom_call.1
$region0: #{tpu_custom_call.1}
  #allocation0 [shape = 'u32[]', space=smem, size = 0x4, offset = 0x4, fixed_abs, tag = 'smem constant byte address 0x4 - core index']
  #allocation1 [shape = 'u32[144,128]{1,0:T(1,128)}', space=vmem, size = 0x12000, scoped, tag = 'internal scratch']
  %s0 = inlined_call_operand.hbm [shape: f32[8,128], index: 0, kind: input, shape index: {}]
  %s1 = inlined_call_operand.hbm [shape: f32[8,128], index: 1, kind: output, shape index: {}]
  %s2 = sld [smem:[#allocation0]]
  $region18: #{tpu_custom_call.1} parent=0
    _
  %s4 = ssub.s32 1, %s2
  %s5 = scalar_select 0, %s4, %s2
  $region1: #{tpu_custom_call.1} parent=0
    #allocation2 [shape = 'u8[4096]{0}', space=vmem, size = 0x1000, scoped, tag = 'input window, operand 0, single buffered']
    #allocation3 [shape = 's32[1]{0}', space=sflag, size = 0x4, scoped, tag = 'scoped memory for tpu_custom_call.1']
    #allocation4 [shape = 's32[1]{0}', space=sflag, size = 0x4, scoped, tag = 'scoped memory for tpu_custom_call.1']
    #allocation5 [shape = 'u8[4096]{0}', space=vmem, size = 0x1000, scoped, tag = 'output window, operand 0, single buffered']
    %6 = vsyncpa [#allocation3], 0
    %7 = vsyncpa [#allocation4], 0
    // Predicated region
    $region2: #{tpu_custom_call.1} parent=1 // pred_check
      _
    $region3: #{tpu_custom_call.1} parent=1 // pred_check_branch
      %9 = sbr.rel (0) target = $region5
    $region4: #{tpu_custom_call.1} parent=1 // pred_region
      %s11 = ssub.s32 128, 128
      %12 = vsyncadd [#allocation3], %s11
      %s14 = sshll.u32 [#allocation2], 4
      %s15 = int_to_ptr.vmem [resolvable:$true] %s14
      %17 = dma.hbm_to_vmem [thread:$0]  %s0, 128, %s15, [#allocation3]
    $region5: #{tpu_custom_call.1} parent=1 // pred_fallthru
      _
    // Predicated region
    $region6: #{tpu_custom_call.1} parent=1 // pred_check
      _
    $region7: #{tpu_custom_call.1} parent=1 // pred_check_branch
      %19 = sbr.rel (0) target = $region9
    $region8: #{tpu_custom_call.1} parent=1 // pred_region
      %20 = dma.done [#allocation3], 128
    $region9: #{tpu_custom_call.1} parent=1 // pred_fallthru
      _
    %v21 = vld [vmem:[#allocation2] sm:$0xff]
    %22 = vst [vmem:[#allocation5] sm:$0xff] %v21
    // Predicated region
    $region10: #{tpu_custom_call.1} parent=1 // pred_check
      _
    $region11: #{tpu_custom_call.1} parent=1 // pred_check_branch
      %24 = sbr.rel (0) target = $region13
    $region12: #{tpu_custom_call.1} parent=1 // pred_region
      %s26 = ssub.s32 128, 128
      %27 = vsyncadd [#allocation4], %s26
      %s29 = sshll.u32 [#allocation5], 4
      %s30 = int_to_ptr.vmem [resolvable:$true] %s29
      %32 = dma.vmem_to_hbm [thread:$0]  %s30, 128, %s1, [#allocation4]
    $region13: #{tpu_custom_call.1} parent=1 // pred_fallthru
      _
    // Predicated region
    $region14: #{tpu_custom_call.1} parent=1 // pred_check
      _
    $region15: #{tpu_custom_call.1} parent=1 // pred_check_branch
      %34 = sbr.rel (0) target = $region17
    $region16: #{tpu_custom_call.1} parent=1 // pred_region
      %35 = dma.done [#allocation4], 128
    $region17: #{tpu_custom_call.1} parent=1 // pred_fallthru
      _
    %36 = vsyncpa [#allocation3], 1
    %37 = vsyncpa [#allocation4], 1

// kernel: tpu_custom_call.1
$region0: #{tpu_custom_call.1}
  #allocation0 [shape = 'u32[]', space=smem, size = 0x4, offset = 0x4, fixed_abs, tag = 'smem constant byte address 0x4 - core index']
  #allocation1 [shape = 'u32[144,128]{1,0:T(1,128)}', space=vmem, size = 0x12000, scoped, tag = 'internal scratch']
  %s0 = inlined_call_operand.hbm [shape: bf16[2,8,32], index: 0, kind: input, shape index: {}]
  %s1 = inlined_call_operand.vmem [shape: f32[2,1,8], index: 1, kind: input, shape index: {}]
  %s2 = inlined_call_operand.hbm [shape: bf16[32,96], index: 2, kind: input, shape index: {}]
  %s3 = inlined_call_operand.vmem [shape: f32[1,96], index: 3, kind: input, shape index: {}]
  %s4 = inlined_call_operand.hbm [shape: bf16[32,32], index: 4, kind: input, shape index: {}]
  %s5 = inlined_call_operand.vmem [shape: f32[1,32], index: 5, kind: input, shape index: {}]
  %s6 = inlined_call_operand.vmem [shape: bf16[32,32], index: 6, kind: input, shape index: {}]
  %s7 = inlined_call_operand.vmem [shape: f32[1,32], index: 7, kind: input, shape index: {}]
  %s8 = inlined_call_operand.hbm [shape: bf16[32,32], index: 8, kind: input, shape index: {}]
  %s9 = inlined_call_operand.vmem [shape: f32[1,32], index: 9, kind: input, shape index: {}]
  %s10 = inlined_call_operand.vmem [shape: f32[1,32], index: 10, kind: input, shape index: {}]
  %s11 = inlined_call_operand.vmem [shape: f32[1,32], index: 11, kind: input, shape index: {}]
  %s12 = inlined_call_operand.vmem [shape: f32[1,32], index: 12, kind: input, shape index: {}]
  %s13 = inlined_call_operand.vmem [shape: f32[1,32], index: 13, kind: input, shape index: {}]
  %s14 = inlined_call_operand.vmem [shape: bf16[4,32], index: 14, kind: input, shape index: {}]
  %s15 = inlined_call_operand.hbm [shape: bf16[2,8,32], index: 15, kind: output, shape index: {0}]
  %s16 = inlined_call_operand.hbm [shape: bf16[2,4,32], index: 16, kind: output, shape index: {1}]
  %17 = xla_tuple %s15, %s16
  %s18 = sld [smem:[#allocation0]]
  $region94: #{tpu_custom_call.1} parent=0
    _
  %s20 = ssub.s32 1, %s18
  %s21 = scalar_select 0, %s20, %s18
  $region1: #{tpu_custom_call.1} parent=0
    #allocation2 [shape = 'u8[4096]{0}', space=vmem, size = 0x1000, scoped, tag = 'input window, operand 0, single buffered']
    #allocation3 [shape = 's32[1]{0}', space=sflag, size = 0x4, scoped, tag = 'scoped memory for tpu_custom_call.1']
    #allocation4 [shape = 's32[1]{0}', space=sflag, size = 0x4, scoped, tag = 'scoped memory for tpu_custom_call.1']
    #allocation5 [shape = 'u8[8192]{0}', space=vmem, size = 0x2000, scoped, tag = 'input window, operand 2, single buffered']
    #allocation6 [shape = 's32[1]{0}', space=sflag, size = 0x4, scoped, tag = 'scoped memory for tpu_custom_call.1']
    #allocation7 [shape = 'u8[8192]{0}', space=vmem, size = 0x2000, scoped, tag = 'input window, operand 4, single buffered']
    #allocation8 [shape = 'u8[8192]{0}', space=vmem, size = 0x2000, scoped, tag = 'input window, operand 8, single buffered']
    #allocation9 [shape = 's32[1]{0}', space=sflag, size = 0x4, scoped, tag = 'scoped memory for tpu_custom_call.1']
    #allocation10 [shape = 'u8[4096]{0}', space=vmem, size = 0x1000, scoped, tag = 'output window, operand 0, single buffered']
    #allocation11 [shape = 'u8[2048]{0}', space=vmem, size = 0x800, scoped, tag = 'output window, operand 1, single buffered']
    #allocation12 [shape = 's32[1]{0}', space=sflag, size = 0x4, scoped, tag = 'scoped memory for tpu_custom_call.1']
    %22 = vsyncpa [#allocation3], 0
    %23 = vsyncpa [#allocation6], 0
    %24 = vsyncpa [#allocation9], 0
    %25 = vsyncpa [#allocation4], 0
    %26 = vsyncpa [#allocation12], 0
    // Predicated region
    $region2: #{tpu_custom_call.1} parent=1 // pred_check
      _
    $region3: #{tpu_custom_call.1} parent=1 // pred_check_branch
      %28 = sbr.rel (0) target = $region5
    $region4: #{tpu_custom_call.1} parent=1 // pred_region
      %s30 = ssub.s32 128, 128
      %31 = vsyncadd [#allocation3], %s30
      %s32 = sshll.u32 [#allocation2], 4
      %s33 = int_to_ptr.vmem [resolvable:$true] %s32
      %38 = dma.hbm_to_vmem [thread:$0]  %s0, 128, %s33, [#allocation3], 64, 64, 4
    $region5: #{tpu_custom_call.1} parent=1 // pred_fallthru
      _
    // Predicated region
    $region6: #{tpu_custom_call.1} parent=1 // pred_check
      _
    $region7: #{tpu_custom_call.1} parent=1 // pred_check_branch
      %40 = sbr.rel (0) target = $region9
    $region8: #{tpu_custom_call.1} parent=1 // pred_region
      _
    $region9: #{tpu_custom_call.1} parent=1 // pred_fallthru
      _
    // Predicated region
    $region10: #{tpu_custom_call.1} parent=1 // pred_check
      _
    $region11: #{tpu_custom_call.1} parent=1 // pred_check_branch
      %42 = sbr.rel (0) target = $region13
    $region12: #{tpu_custom_call.1} parent=1 // pred_region
      %s44 = ssub.s32 256, 256
      %45 = vsyncadd [#allocation6], %s44
      %s46 = sshll.u32 [#allocation5], 4
      %s47 = int_to_ptr.vmem [resolvable:$true] %s46
      %52 = dma.hbm_to_vmem [thread:$0]  %s2, 256, %s47, [#allocation6], 64, 64, 4
    $region13: #{tpu_custom_call.1} parent=1 // pred_fallthru
      _
    // Predicated region
    $region14: #{tpu_custom_call.1} parent=1 // pred_check
      _
    $region15: #{tpu_custom_call.1} parent=1 // pred_check_branch
      %54 = sbr.rel (0) target = $region17
    $region16: #{tpu_custom_call.1} parent=1 // pred_region
      _
    $region17: #{tpu_custom_call.1} parent=1 // pred_fallthru
      _
    // Predicated region
    $region18: #{tpu_custom_call.1} parent=1 // pred_check
      _
    $region19: #{tpu_custom_call.1} parent=1 // pred_check_branch
      %56 = sbr.rel (0) target = $region21
    $region20: #{tpu_custom_call.1} parent=1 // pred_region
      %s58 = ssub.s32 256, 256
      %59 = vsyncadd [#allocation6], %s58
      %s60 = sshll.u32 [#allocation7], 4
      %s61 = int_to_ptr.vmem [resolvable:$true] %s60
      %66 = dma.hbm_to_vmem [thread:$0]  %s4, 256, %s61, [#allocation6], 64, 64, 4
    $region21: #{tpu_custom_call.1} parent=1 // pred_fallthru
      _
    // Predicated region
    $region22: #{tpu_custom_call.1} parent=1 // pred_check
      _
    $region23: #{tpu_custom_call.1} parent=1 // pred_check_branch
      %68 = sbr.rel (0) target = $region25
    $region24: #{tpu_custom_call.1} parent=1 // pred_region
      _
    $region25: #{tpu_custom_call.1} parent=1 // pred_fallthru
      _
    // Predicated region
    $region26: #{tpu_custom_call.1} parent=1 // pred_check
      _
    $region27: #{tpu_custom_call.1} parent=1 // pred_check_branch
      %70 = sbr.rel (0) target = $region29
    $region28: #{tpu_custom_call.1} parent=1 // pred_region
      _
    $region29: #{tpu_custom_call.1} parent=1 // pred_fallthru
      _
    // Predicated region
    $region30: #{tpu_custom_call.1} parent=1 // pred_check
      _
    $region31: #{tpu_custom_call.1} parent=1 // pred_check_branch
      %72 = sbr.rel (0) target = $region33
    $region32: #{tpu_custom_call.1} parent=1 // pred_region
      _
    $region33: #{tpu_custom_call.1} parent=1 // pred_fallthru
      _
    // Predicated region
    $region34: #{tpu_custom_call.1} parent=1 // pred_check
      _
    $region35: #{tpu_custom_call.1} parent=1 // pred_check_branch
      %74 = sbr.rel (0) target = $region37
    $region36: #{tpu_custom_call.1} parent=1 // pred_region
      %s76 = ssub.s32 256, 256
      %77 = vsyncadd [#allocation9], %s76
      %s78 = sshll.u32 [#allocation8], 4
      %s79 = int_to_ptr.vmem [resolvable:$true] %s78
      %84 = dma.hbm_to_vmem [thread:$0]  %s8, 256, %s79, [#allocation9], 64, 64, 4
    $region37: #{tpu_custom_call.1} parent=1 // pred_fallthru
      _
    // Predicated region
    $region38: #{tpu_custom_call.1} parent=1 // pred_check
      _
    $region39: #{tpu_custom_call.1} parent=1 // pred_check_branch
      %86 = sbr.rel (0) target = $region41
    $region40: #{tpu_custom_call.1} parent=1 // pred_region
      _
    $region41: #{tpu_custom_call.1} parent=1 // pred_fallthru
      _
    // Predicated region
    $region42: #{tpu_custom_call.1} parent=1 // pred_check
      _
    $region43: #{tpu_custom_call.1} parent=1 // pred_check_branch
      %88 = sbr.rel (0) target = $region45
    $region44: #{tpu_custom_call.1} parent=1 // pred_region
      _
    $region45: #{tpu_custom_call.1} parent=1 // pred_fallthru
      _
    // Predicated region
    $region46: #{tpu_custom_call.1} parent=1 // pred_check
      _
    $region47: #{tpu_custom_call.1} parent=1 // pred_check_branch
      %90 = sbr.rel (0) target = $region49
    $region48: #{tpu_custom_call.1} parent=1 // pred_region
      _
    $region49: #{tpu_custom_call.1} parent=1 // pred_fallthru
      _
    // Predicated region
    $region50: #{tpu_custom_call.1} parent=1 // pred_check
      _
    $region51: #{tpu_custom_call.1} parent=1 // pred_check_branch
      %92 = sbr.rel (0) target = $region53
    $region52: #{tpu_custom_call.1} parent=1 // pred_region
      _
    $region53: #{tpu_custom_call.1} parent=1 // pred_fallthru
      _
    // Predicated region
    $region54: #{tpu_custom_call.1} parent=1 // pred_check
      _
    $region55: #{tpu_custom_call.1} parent=1 // pred_check_branch
      %94 = sbr.rel (0) target = $region57
    $region56: #{tpu_custom_call.1} parent=1 // pred_region
      _
    $region57: #{tpu_custom_call.1} parent=1 // pred_fallthru
      _
    // Predicated region
    $region58: #{tpu_custom_call.1} parent=1 // pred_check
      _
    $region59: #{tpu_custom_call.1} parent=1 // pred_check_branch
      %96 = sbr.rel (0) target = $region61
    $region60: #{tpu_custom_call.1} parent=1 // pred_region
      _
    $region61: #{tpu_custom_call.1} parent=1 // pred_fallthru
      _
    // Predicated region
    $region62: #{tpu_custom_call.1} parent=1 // pred_check
      _
    $region63: #{tpu_custom_call.1} parent=1 // pred_check_branch
      %98 = sbr.rel (0) target = $region65
    $region64: #{tpu_custom_call.1} parent=1 // pred_region
      %99 = dma.done [#allocation3], 128
    $region65: #{tpu_custom_call.1} parent=1 // pred_fallthru
      _
    // Predicated region
    $region66: #{tpu_custom_call.1} parent=1 // pred_check
      _
    $region67: #{tpu_custom_call.1} parent=1 // pred_check_branch
      %101 = sbr.rel (0) target = $region69
    $region68: #{tpu_custom_call.1} parent=1 // pred_region
      %102 = dma.done [#allocation6], 256
    $region69: #{tpu_custom_call.1} parent=1 // pred_fallthru
      _
    // Predicated region
    $region70: #{tpu_custom_call.1} parent=1 // pred_check
      _
    $region71: #{tpu_custom_call.1} parent=1 // pred_check_branch
      %104 = sbr.rel (0) target = $region73
    $region72: #{tpu_custom_call.1} parent=1 // pred_region
      %105 = dma.done [#allocation6], 256
    $region73: #{tpu_custom_call.1} parent=1 // pred_fallthru
      _
    // Predicated region
    $region74: #{tpu_custom_call.1} parent=1 // pred_check
      _
    $region75: #{tpu_custom_call.1} parent=1 // pred_check_branch
      %107 = sbr.rel (0) target = $region77
    $region76: #{tpu_custom_call.1} parent=1 // pred_region
      %108 = dma.done [#allocation9], 256
    $region77: #{tpu_custom_call.1} parent=1 // pred_fallthru
      _
    %v110 = vld [vmem:[%s1] sm:$0x1]
    %v111 = vld [vmem:[%s1 + $0x1] sm:$0x1]
    %v112 = vld [vmem:[#allocation2] sm:$0xf]
    %v113 = vld [vmem:[#allocation2 + $0x4] sm:$0xf]
    %v114 = vld [vmem:[#allocation5] sm:$0xf]
    %v115 = vld [vmem:[#allocation5 + $0x4] sm:$0xf]
    %v116 = vld [vmem:[#allocation5 + $0x8] sm:$0xf]
    %v117 = vld [vmem:[#allocation5 + $0xc] sm:$0xf]
    %v118 = vld [vmem:[%s3] sm:$0x1]
    %v120 = vlaneseq
    %v121 = vshrl.u32 %v120, 7
    %v122 = vsub.s32 0, %v121
    %v123 = vrot.slane %v118, %v122
    %v127 = vunpack.c.l.b16 %v112
    %v128 = vunpack.c.l.b16 %v113
    %v129 = vpack.c.b16 %v128, %v127
    %v134 = vunpack.c.l.b16 %v114
    %v135 = vunpack.c.l.b16 %v115
    %v136 = vunpack.c.l.b16 %v116
    %v137 = vunpack.c.l.b16 %v117
    %v138 = vpack.c.b16 %v135, %v134
    %v139 = vpack.c.b16 %v137, %v136
    %vm142 = vcmask 261120
    %v144 = vsel %vm142, %v129, 0
    %146 = vmatprep.subr.bf16.mxu0 0
    %147 = vmatpush1.bf16.msra.mxu0 %v138
    %148 = vmatprep.subr.bf16.mxu0 0
    %149 = vmatpush1.bf16.msra.mxu0 %v139
    %150 = vmatprep.subr.bf16.mxu0 0
    %151 = vmatpush1.bf16.msra.mxu0 0
    %152 = vmatprep.subr.bf16.mxu0 0
    %153 = vmatpush1.bf16.msra.mxu0 0
    %154 = vmatprep.subr.bf16.mxu0 0
    %155 = vmatpush1.bf16.msra.mxu0 0
    %156 = vmatprep.subr.bf16.mxu0 0
    %157 = vmatpush1.bf16.msra.mxu0 0
    %158 = vmatprep.subr.bf16.mxu0 0
    %159 = vmatpush1.bf16.msra.mxu0 0
    %160 = vmatprep.subr.bf16.mxu0 0
    %161 = vmatpush1.bf16.msra.mxu0 0
    %162 = vmatprep.subr.bf16.mxu0 0
    %163 = vmatpush1.bf16.msra.mxu0 0
    %164 = vmatprep.subr.bf16.mxu0 0
    %165 = vmatpush1.bf16.msra.mxu0 0
    %166 = vmatprep.subr.bf16.mxu0 0
    %167 = vmatpush1.bf16.msra.mxu0 0
    %168 = vmatprep.subr.bf16.mxu0 0
    %169 = vmatpush1.bf16.msra.mxu0 0
    %170 = vmatprep.subr.bf16.mxu0 0
    %171 = vmatpush1.bf16.msra.mxu0 0
    %172 = vmatprep.subr.bf16.mxu0 0
    %173 = vmatpush1.bf16.msra.mxu0 0
    %174 = vmatprep.subr.bf16.mxu0 0
    %175 = vmatpush1.bf16.msra.mxu0 0
    %176 = vmatprep.subr.bf16.mxu0 0
    %177 = vmatpush1.bf16.msra.mxu0 0
    %178 = vmatprep.mubr.bf16.mxu0 0
    %179 = vmatmul.mubr.bf16.gmra.mrb[0].mxu0 %v144
    %v180 = vpop.f32.mrb[0].mxu0
    %v181 = vadd.f32 %v123, %v180
    %v182 = vpop.f32.mrb[0].mxu0
    %v183 = vpop.f32.mrb[0].mxu0
    %v184 = vadd.f32 %v123, %v183
    %v185 = vpop.f32.mrb[0].mxu0
    %186 = vdwg.mxu0
    %v187 = vpack.c.bf16 %v184, %v181
    %v189 = vunpack.c.l.b16 %v187
    %v190 = vunpack.c.h.b16 %v187
    %v191 = vpack.c.b16 %v189, %v189
    %v192 = vpack.c.b16 %v190, %v190
    %v195 = vlaneseq
    %v196 = vshrl.u32 %v195, 7
    %v197 = vsub.s32 0, %v196
    %v198 = vrot.slane %v110, %v197
    %v199 = vlaneseq
    %v200 = vshrl.u32 %v199, 7
    %v201 = vsub.s32 0, %v200
    %v202 = vrot.slane %v111, %v201
    %205 = vrot.lane.b32.xlu0 %v191, 96
    %v206 = vpop.permute.xlu0 %205
    %vm207 = vcmask 64512
    %v209 = vsel %vm207, %v191, 0
    %v212 = vsel %vm207, %v206, 0
    %214 = vmatprep.subr.bf16.mxu0 0
    %215 = vmatpush1.bf16.xpose.msra.mxu0 %v212
    %216 = vmatprep.subr.bf16.mxu0 0
    %217 = vmatpush1.bf16.xpose.msra.mxu0 0
    %218 = vmatprep.subr.bf16.mxu0 0
    %219 = vmatpush1.bf16.xpose.msra.mxu0 0
    %220 = vmatprep.subr.bf16.mxu0 0
    %221 = vmatpush1.bf16.xpose.msra.mxu0 0
    %222 = vmatprep.subr.bf16.mxu0 0
    %223 = vmatpush1.bf16.xpose.msra.mxu0 0
    %224 = vmatprep.subr.bf16.mxu0 0
    %225 = vmatpush1.bf16.xpose.msra.mxu0 0
    %226 = vmatprep.subr.bf16.mxu0 0
    %227 = vmatpush1.bf16.xpose.msra.mxu0 0
    %228 = vmatprep.subr.bf16.mxu0 0
    %229 = vmatpush1.bf16.xpose.msra.mxu0 0
    %230 = vmatprep.subr.bf16.mxu0 0
    %231 = vmatpush1.bf16.xpose.msra.mxu0 0
    %232 = vmatprep.subr.bf16.mxu0 0
    %233 = vmatpush1.bf16.xpose.msra.mxu0 0
    %234 = vmatprep.subr.bf16.mxu0 0
    %235 = vmatpush1.bf16.xpose.msra.mxu0 0
    %236 = vmatprep.subr.bf16.mxu0 0
    %237 = vmatpush1.bf16.xpose.msra.mxu0 0
    %238 = vmatprep.subr.bf16.mxu0 0
    %239 = vmatpush1.bf16.xpose.msra.mxu0 0
    %240 = vmatprep.subr.bf16.mxu0 0
    %241 = vmatpush1.bf16.xpose.msra.mxu0 0
    %242 = vmatprep.subr.bf16.mxu0 0
    %243 = vmatpush1.bf16.xpose.msra.mxu0 0
    %244 = vmatprep.subr.bf16.mxu0 0
    %245 = vmatpush1.bf16.xpose.msra.mxu0 0
    %246 = vmatprep.mubr.bf16.mxu0 0
    %247 = vmatmul.mubr.bf16.gmra.mrb[0].mxu0 %v209
    %v248 = vpop.f32.mrb[0].mxu0
    %v249 = vadd.f32 %v198, %v248
    %v250 = vpop.f32.mrb[0].mxu0
    %v251 = vpop.f32.mrb[0].mxu0
    %v252 = vpop.f32.mrb[0].mxu0
    %253 = vdwg.mxu0
    %254 = vrot.lane.b32.xlu0 %v192, 96
    %v255 = vpop.permute.xlu0 %254
    %v257 = vsel %vm207, %v192, 0
    %v260 = vsel %vm207, %v255, 0
    %262 = vmatprep.subr.bf16.mxu0 0
    %263 = vmatpush1.bf16.xpose.msra.mxu0 %v260
    %264 = vmatprep.subr.bf16.mxu0 0
    %265 = vmatpush1.bf16.xpose.msra.mxu0 0
    %266 = vmatprep.subr.bf16.mxu0 0
    %267 = vmatpush1.bf16.xpose.msra.mxu0 0
    %268 = vmatprep.subr.bf16.mxu0 0
    %269 = vmatpush1.bf16.xpose.msra.mxu0 0
    %270 = vmatprep.subr.bf16.mxu0 0
    %271 = vmatpush1.bf16.xpose.msra.mxu0 0
    %272 = vmatprep.subr.bf16.mxu0 0
    %273 = vmatpush1.bf16.xpose.msra.mxu0 0
    %274 = vmatprep.subr.bf16.mxu0 0
    %275 = vmatpush1.bf16.xpose.msra.mxu0 0
    %276 = vmatprep.subr.bf16.mxu0 0
    %277 = vmatpush1.bf16.xpose.msra.mxu0 0
    %278 = vmatprep.subr.bf16.mxu0 0
    %279 = vmatpush1.bf16.xpose.msra.mxu0 0
    %280 = vmatprep.subr.bf16.mxu0 0
    %281 = vmatpush1.bf16.xpose.msra.mxu0 0
    %282 = vmatprep.subr.bf16.mxu0 0
    %283 = vmatpush1.bf16.xpose.msra.mxu0 0
    %284 = vmatprep.subr.bf16.mxu0 0
    %285 = vmatpush1.bf16.xpose.msra.mxu0 0
    %286 = vmatprep.subr.bf16.mxu0 0
    %287 = vmatpush1.bf16.xpose.msra.mxu0 0
    %288 = vmatprep.subr.bf16.mxu0 0
    %289 = vmatpush1.bf16.xpose.msra.mxu0 0
    %290 = vmatprep.subr.bf16.mxu0 0
    %291 = vmatpush1.bf16.xpose.msra.mxu0 0
    %292 = vmatprep.subr.bf16.mxu0 0
    %293 = vmatpush1.bf16.xpose.msra.mxu0 0
    %294 = vmatprep.mubr.bf16.mxu0 0
    %295 = vmatmul.mubr.bf16.gmra.mrb[0].mxu0 %v257
    %v296 = vpop.f32.mrb[0].mxu0
    %v297 = vadd.f32 %v202, %v296
    %v298 = vpop.f32.mrb[0].mxu0
    %v299 = vpop.f32.mrb[0].mxu0
    %v300 = vpop.f32.mrb[0].mxu0
    %301 = vdwg.mxu0
    %v302 = vsel %vm207, %v249, -inf
    %303 = vmax.xlane.f32.xlu0 %v302
    %v304 = vpop.xlane.xlu0 %303
    %v305 = vsel %vm207, %v297, -inf
    %306 = vmax.xlane.f32.xlu0 %v305
    %v307 = vpop.xlane.xlu0 %306
    %v308 = vsub.f32 %v249, %v304
    %v309 = vsub.f32 %v297, %v307
    %v310 = vmul.f32 %v308, 1.442695
    %v311 = vpow.pop %v310
    %v312 = vmul.f32 %v309, 1.442695
    %v313 = vpow.pop %v312
    %v314 = vsel %vm207, %v311, 0.0
    %315 = vadd.xlane.f32.xlu0 %v314
    %v316 = vpop.xlane.xlu0 %315
    %v317 = vsel %vm207, %v313, 0.0
    %318 = vadd.xlane.f32.xlu0 %v317
    %v319 = vpop.xlane.xlu0 %318
    %v320 = vrcp.pop %v316
    %v321 = vrcp.pop %v319
    %v322 = vmul.f32 %v311, %v320
    %v323 = vmul.f32 %v313, %v321
    %v324 = vpack.c.bf16 %v322, %v322
    %v325 = vpack.c.bf16 %v323, %v323
    %326 = vrot.lane.b32.xlu0 %v191, 64
    %v327 = vpop.permute.xlu0 %326
    %v329 = vsel %vm207, %v324, 0
    %vm331 = vcmask 1043456
    %v333 = vsel %vm331, %v327, 0
    %335 = vmatprep.subr.bf16.mxu0 0
    %336 = vmatpush1.bf16.msra.mxu0 %v333
    %337 = vmatprep.subr.bf16.mxu0 0
    %338 = vmatpush1.bf16.msra.mxu0 0
    %339 = vmatprep.subr.bf16.mxu0 0
    %340 = vmatpush1.bf16.msra.mxu0 0
    %341 = vmatprep.subr.bf16.mxu0 0
    %342 = vmatpush1.bf16.msra.mxu0 0
    %343 = vmatprep.subr.bf16.mxu0 0
    %344 = vmatpush1.bf16.msra.mxu0 0
    %345 = vmatprep.subr.bf16.mxu0 0
    %346 = vmatpush1.bf16.msra.mxu0 0
    %347 = vmatprep.subr.bf16.mxu0 0
    %348 = vmatpush1.bf16.msra.mxu0 0
    %349 = vmatprep.subr.bf16.mxu0 0
    %350 = vmatpush1.bf16.msra.mxu0 0
    %351 = vmatprep.subr.bf16.mxu0 0
    %352 = vmatpush1.bf16.msra.mxu0 0
    %353 = vmatprep.subr.bf16.mxu0 0
    %354 = vmatpush1.bf16.msra.mxu0 0
    %355 = vmatprep.subr.bf16.mxu0 0
    %356 = vmatpush1.bf16.msra.mxu0 0
    %357 = vmatprep.subr.bf16.mxu0 0
    %358 = vmatpush1.bf16.msra.mxu0 0
    %359 = vmatprep.subr.bf16.mxu0 0
    %360 = vmatpush1.bf16.msra.mxu0 0
    %361 = vmatprep.subr.bf16.mxu0 0
    %362 = vmatpush1.bf16.msra.mxu0 0
    %363 = vmatprep.subr.bf16.mxu0 0
    %364 = vmatpush1.bf16.msra.mxu0 0
    %365 = vmatprep.subr.bf16.mxu0 0
    %366 = vmatpush1.bf16.msra.mxu0 0
    %367 = vmatprep.mubr.bf16.mxu0 0
    %368 = vmatmul.mubr.bf16.gmra.mrb[0].mxu0 %v329
    %v369 = vpop.f32.mrb[0].mxu0
    %v370 = vadd.f32 0.0, %v369
    %v371 = vpop.f32.mrb[0].mxu0
    %v372 = vpop.f32.mrb[0].mxu0
    %v373 = vpop.f32.mrb[0].mxu0
    %374 = vdwg.mxu0
    %375 = vrot.lane.b32.xlu0 %v192, 64
    %v376 = vpop.permute.xlu0 %375
    %v378 = vsel %vm207, %v325, 0
    %v381 = vsel %vm331, %v376, 0
    %383 = vmatprep.subr.bf16.mxu0 0
    %384 = vmatpush1.bf16.msra.mxu0 %v381
    %385 = vmatprep.subr.bf16.mxu0 0
    %386 = vmatpush1.bf16.msra.mxu0 0
    %387 = vmatprep.subr.bf16.mxu0 0
    %388 = vmatpush1.bf16.msra.mxu0 0
    %389 = vmatprep.subr.bf16.mxu0 0
    %390 = vmatpush1.bf16.msra.mxu0 0
    %391 = vmatprep.subr.bf16.mxu0 0
    %392 = vmatpush1.bf16.msra.mxu0 0
    %393 = vmatprep.subr.bf16.mxu0 0
    %394 = vmatpush1.bf16.msra.mxu0 0
    %395 = vmatprep.subr.bf16.mxu0 0
    %396 = vmatpush1.bf16.msra.mxu0 0
    %397 = vmatprep.subr.bf16.mxu0 0
    %398 = vmatpush1.bf16.msra.mxu0 0
    %399 = vmatprep.subr.bf16.mxu0 0
    %400 = vmatpush1.bf16.msra.mxu0 0
    %401 = vmatprep.subr.bf16.mxu0 0
    %402 = vmatpush1.bf16.msra.mxu0 0
    %403 = vmatprep.subr.bf16.mxu0 0
    %404 = vmatpush1.bf16.msra.mxu0 0
    %405 = vmatprep.subr.bf16.mxu0 0
    %406 = vmatpush1.bf16.msra.mxu0 0
    %407 = vmatprep.subr.bf16.mxu0 0
    %408 = vmatpush1.bf16.msra.mxu0 0
    %409 = vmatprep.subr.bf16.mxu0 0
    %410 = vmatpush1.bf16.msra.mxu0 0
    %411 = vmatprep.subr.bf16.mxu0 0
    %412 = vmatpush1.bf16.msra.mxu0 0
    %413 = vmatprep.subr.bf16.mxu0 0
    %414 = vmatpush1.bf16.msra.mxu0 0
    %415 = vmatprep.mubr.bf16.mxu0 0
    %416 = vmatmul.mubr.bf16.gmra.mrb[0].mxu0 %v378
    %v417 = vpop.f32.mrb[0].mxu0
    %v418 = vadd.f32 0.0, %v417
    %v419 = vpop.f32.mrb[0].mxu0
    %v420 = vpop.f32.mrb[0].mxu0
    %v421 = vpop.f32.mrb[0].mxu0
    %422 = vdwg.mxu0
    %423 = vrot.lane.b32.xlu0 %v191, 120
    %v424 = vpop.permute.xlu0 %423
    %425 = vrot.lane.b32.xlu0 %v191, 88
    %v426 = vpop.permute.xlu0 %425
    %v428 = vsel %vm207, %v424, 0
    %v431 = vsel %vm207, %v426, 0
    %433 = vmatprep.subr.bf16.mxu0 0
    %434 = vmatpush1.bf16.xpose.msra.mxu0 %v431
    %435 = vmatprep.subr.bf16.mxu0 0
    %436 = vmatpush1.bf16.xpose.msra.mxu0 0
    %437 = vmatprep.subr.bf16.mxu0 0
    %438 = vmatpush1.bf16.xpose.msra.mxu0 0
    %439 = vmatprep.subr.bf16.mxu0 0
    %440 = vmatpush1.bf16.xpose.msra.mxu0 0
    %441 = vmatprep.subr.bf16.mxu0 0
    %442 = vmatpush1.bf16.xpose.msra.mxu0 0
    %443 = vmatprep.subr.bf16.mxu0 0
    %444 = vmatpush1.bf16.xpose.msra.mxu0 0
    %445 = vmatprep.subr.bf16.mxu0 0
    %446 = vmatpush1.bf16.xpose.msra.mxu0 0
    %447 = vmatprep.subr.bf16.mxu0 0
    %448 = vmatpush1.bf16.xpose.msra.mxu0 0
    %449 = vmatprep.subr.bf16.mxu0 0
    %450 = vmatpush1.bf16.xpose.msra.mxu0 0
    %451 = vmatprep.subr.bf16.mxu0 0
    %452 = vmatpush1.bf16.xpose.msra.mxu0 0
    %453 = vmatprep.subr.bf16.mxu0 0
    %454 = vmatpush1.bf16.xpose.msra.mxu0 0
    %455 = vmatprep.subr.bf16.mxu0 0
    %456 = vmatpush1.bf16.xpose.msra.mxu0 0
    %457 = vmatprep.subr.bf16.mxu0 0
    %458 = vmatpush1.bf16.xpose.msra.mxu0 0
    %459 = vmatprep.subr.bf16.mxu0 0
    %460 = vmatpush1.bf16.xpose.msra.mxu0 0
    %461 = vmatprep.subr.bf16.mxu0 0
    %462 = vmatpush1.bf16.xpose.msra.mxu0 0
    %463 = vmatprep.subr.bf16.mxu0 0
    %464 = vmatpush1.bf16.xpose.msra.mxu0 0
    %465 = vmatprep.mubr.bf16.mxu0 0
    %466 = vmatmul.mubr.bf16.gmra.mrb[0].mxu0 %v428
    %v467 = vpop.f32.mrb[0].mxu0
    %v468 = vadd.f32 %v198, %v467
    %v469 = vpop.f32.mrb[0].mxu0
    %v470 = vpop.f32.mrb[0].mxu0
    %v471 = vpop.f32.mrb[0].mxu0
    %472 = vdwg.mxu0
    %473 = vrot.lane.b32.xlu0 %v192, 120
    %v474 = vpop.permute.xlu0 %473
    %475 = vrot.lane.b32.xlu0 %v192, 88
    %v476 = vpop.permute.xlu0 %475
    %v478 = vsel %vm207, %v474, 0
    %v481 = vsel %vm207, %v476, 0
    %483 = vmatprep.subr.bf16.mxu0 0
    %484 = vmatpush1.bf16.xpose.msra.mxu0 %v481
    %485 = vmatprep.subr.bf16.mxu0 0
    %486 = vmatpush1.bf16.xpose.msra.mxu0 0
    %487 = vmatprep.subr.bf16.mxu0 0
    %488 = vmatpush1.bf16.xpose.msra.mxu0 0
    %489 = vmatprep.subr.bf16.mxu0 0
    %490 = vmatpush1.bf16.xpose.msra.mxu0 0
    %491 = vmatprep.subr.bf16.mxu0 0
    %492 = vmatpush1.bf16.xpose.msra.mxu0 0
    %493 = vmatprep.subr.bf16.mxu0 0
    %494 = vmatpush1.bf16.xpose.msra.mxu0 0
    %495 = vmatprep.subr.bf16.mxu0 0
    %496 = vmatpush1.bf16.xpose.msra.mxu0 0
    %497 = vmatprep.subr.bf16.mxu0 0
    %498 = vmatpush1.bf16.xpose.msra.mxu0 0
    %499 = vmatprep.subr.bf16.mxu0 0
    %500 = vmatpush1.bf16.xpose.msra.mxu0 0
    %501 = vmatprep.subr.bf16.mxu0 0
    %502 = vmatpush1.bf16.xpose.msra.mxu0 0
    %503 = vmatprep.subr.bf16.mxu0 0
    %504 = vmatpush1.bf16.xpose.msra.mxu0 0
    %505 = vmatprep.subr.bf16.mxu0 0
    %506 = vmatpush1.bf16.xpose.msra.mxu0 0
    %507 = vmatprep.subr.bf16.mxu0 0
    %508 = vmatpush1.bf16.xpose.msra.mxu0 0
    %509 = vmatprep.subr.bf16.mxu0 0
    %510 = vmatpush1.bf16.xpose.msra.mxu0 0
    %511 = vmatprep.subr.bf16.mxu0 0
    %512 = vmatpush1.bf16.xpose.msra.mxu0 0
    %513 = vmatprep.subr.bf16.mxu0 0
    %514 = vmatpush1.bf16.xpose.msra.mxu0 0
    %515 = vmatprep.mubr.bf16.mxu0 0
    %516 = vmatmul.mubr.bf16.gmra.mrb[0].mxu0 %v478
    %v517 = vpop.f32.mrb[0].mxu0
    %v518 = vadd.f32 %v202, %v517
    %v519 = vpop.f32.mrb[0].mxu0
    %v520 = vpop.f32.mrb[0].mxu0
    %v521 = vpop.f32.mrb[0].mxu0
    %522 = vdwg.mxu0
    %v523 = vsel %vm207, %v468, -inf
    %524 = vmax.xlane.f32.xlu0 %v523
    %v525 = vpop.xlane.xlu0 %524
    %v526 = vsel %vm207, %v518, -inf
    %527 = vmax.xlane.f32.xlu0 %v526
    %v528 = vpop.xlane.xlu0 %527
    %v529 = vsub.f32 %v468, %v525
    %v530 = vsub.f32 %v518, %v528
    %v531 = vmul.f32 %v529, 1.442695
    %v532 = vpow.pop %v531
    %v533 = vmul.f32 %v530, 1.442695
    %v534 = vpow.pop %v533
    %v535 = vsel %vm207, %v532, 0.0
    %536 = vadd.xlane.f32.xlu0 %v535
    %v537 = vpop.xlane.xlu0 %536
    %v538 = vsel %vm207, %v534, 0.0
    %539 = vadd.xlane.f32.xlu0 %v538
    %v540 = vpop.xlane.xlu0 %539
    %v541 = vrcp.pop %v537
    %v542 = vrcp.pop %v540
    %v543 = vmul.f32 %v532, %v541
    %v544 = vmul.f32 %v534, %v542
    %v545 = vpack.c.bf16 %v543, %v543
    %v546 = vpack.c.bf16 %v544, %v544
    %547 = vrot.lane.b32.xlu0 %v191, 56
    %v548 = vpop.permute.xlu0 %547
    %v550 = vsel %vm207, %v545, 0
    %v553 = vsel %vm331, %v548, 0
    %555 = vmatprep.subr.bf16.mxu0 0
    %556 = vmatpush1.bf16.msra.mxu0 %v553
    %557 = vmatprep.subr.bf16.mxu0 0
    %558 = vmatpush1.bf16.msra.mxu0 0
    %559 = vmatprep.subr.bf16.mxu0 0
    %560 = vmatpush1.bf16.msra.mxu0 0
    %561 = vmatprep.subr.bf16.mxu0 0
    %562 = vmatpush1.bf16.msra.mxu0 0
    %563 = vmatprep.subr.bf16.mxu0 0
    %564 = vmatpush1.bf16.msra.mxu0 0
    %565 = vmatprep.subr.bf16.mxu0 0
    %566 = vmatpush1.bf16.msra.mxu0 0
    %567 = vmatprep.subr.bf16.mxu0 0
    %568 = vmatpush1.bf16.msra.mxu0 0
    %569 = vmatprep.subr.bf16.mxu0 0
    %570 = vmatpush1.bf16.msra.mxu0 0
    %571 = vmatprep.subr.bf16.mxu0 0
    %572 = vmatpush1.bf16.msra.mxu0 0
    %573 = vmatprep.subr.bf16.mxu0 0
    %574 = vmatpush1.bf16.msra.mxu0 0
    %575 = vmatprep.subr.bf16.mxu0 0
    %576 = vmatpush1.bf16.msra.mxu0 0
    %577 = vmatprep.subr.bf16.mxu0 0
    %578 = vmatpush1.bf16.msra.mxu0 0
    %579 = vmatprep.subr.bf16.mxu0 0
    %580 = vmatpush1.bf16.msra.mxu0 0
    %581 = vmatprep.subr.bf16.mxu0 0
    %582 = vmatpush1.bf16.msra.mxu0 0
    %583 = vmatprep.subr.bf16.mxu0 0
    %584 = vmatpush1.bf16.msra.mxu0 0
    %585 = vmatprep.subr.bf16.mxu0 0
    %586 = vmatpush1.bf16.msra.mxu0 0
    %587 = vmatprep.mubr.bf16.mxu0 0
    %588 = vmatmul.mubr.bf16.gmra.mrb[0].mxu0 %v550
    %v589 = vpop.f32.mrb[0].mxu0
    %v590 = vadd.f32 0.0, %v589
    %v591 = vpop.f32.mrb[0].mxu0
    %v592 = vpop.f32.mrb[0].mxu0
    %v593 = vpop.f32.mrb[0].mxu0
    %594 = vdwg.mxu0
    %595 = vrot.lane.b32.xlu0 %v192, 56
    %v596 = vpop.permute.xlu0 %595
    %v598 = vsel %vm207, %v546, 0
    %v601 = vsel %vm331, %v596, 0
    %603 = vmatprep.subr.bf16.mxu0 0
    %604 = vmatpush1.bf16.msra.mxu0 %v601
    %605 = vmatprep.subr.bf16.mxu0 0
    %606 = vmatpush1.bf16.msra.mxu0 0
    %607 = vmatprep.subr.bf16.mxu0 0
    %608 = vmatpush1.bf16.msra.mxu0 0
    %609 = vmatprep.subr.bf16.mxu0 0
    %610 = vmatpush1.bf16.msra.mxu0 0
    %611 = vmatprep.subr.bf16.mxu0 0
    %612 = vmatpush1.bf16.msra.mxu0 0
    %613 = vmatprep.subr.bf16.mxu0 0
    %614 = vmatpush1.bf16.msra.mxu0 0
    %615 = vmatprep.subr.bf16.mxu0 0
    %616 = vmatpush1.bf16.msra.mxu0 0
    %617 = vmatprep.subr.bf16.mxu0 0
    %618 = vmatpush1.bf16.msra.mxu0 0
    %619 = vmatprep.subr.bf16.mxu0 0
    %620 = vmatpush1.bf16.msra.mxu0 0
    %621 = vmatprep.subr.bf16.mxu0 0
    %622 = vmatpush1.bf16.msra.mxu0 0
    %623 = vmatprep.subr.bf16.mxu0 0
    %624 = vmatpush1.bf16.msra.mxu0 0
    %625 = vmatprep.subr.bf16.mxu0 0
    %626 = vmatpush1.bf16.msra.mxu0 0
    %627 = vmatprep.subr.bf16.mxu0 0
    %628 = vmatpush1.bf16.msra.mxu0 0
    %629 = vmatprep.subr.bf16.mxu0 0
    %630 = vmatpush1.bf16.msra.mxu0 0
    %631 = vmatprep.subr.bf16.mxu0 0
    %632 = vmatpush1.bf16.msra.mxu0 0
    %633 = vmatprep.subr.bf16.mxu0 0
    %634 = vmatpush1.bf16.msra.mxu0 0
    %635 = vmatprep.mubr.bf16.mxu0 0
    %636 = vmatmul.mubr.bf16.gmra.mrb[0].mxu0 %v598
    %v637 = vpop.f32.mrb[0].mxu0
    %v638 = vadd.f32 0.0, %v637
    %v639 = vpop.f32.mrb[0].mxu0
    %v640 = vpop.f32.mrb[0].mxu0
    %v641 = vpop.f32.mrb[0].mxu0
    %642 = vdwg.mxu0
    %643 = vrot.lane.b32.xlu0 %v191, 112
    %v644 = vpop.permute.xlu0 %643
    %645 = vrot.lane.b32.xlu0 %v191, 80
    %v646 = vpop.permute.xlu0 %645
    %v648 = vsel %vm207, %v644, 0
    %v651 = vsel %vm207, %v646, 0
    %653 = vmatprep.subr.bf16.mxu0 0
    %654 = vmatpush1.bf16.xpose.msra.mxu0 %v651
    %655 = vmatprep.subr.bf16.mxu0 0
    %656 = vmatpush1.bf16.xpose.msra.mxu0 0
    %657 = vmatprep.subr.bf16.mxu0 0
    %658 = vmatpush1.bf16.xpose.msra.mxu0 0
    %659 = vmatprep.subr.bf16.mxu0 0
    %660 = vmatpush1.bf16.xpose.msra.mxu0 0
    %661 = vmatprep.subr.bf16.mxu0 0
    %662 = vmatpush1.bf16.xpose.msra.mxu0 0
    %663 = vmatprep.subr.bf16.mxu0 0
    %664 = vmatpush1.bf16.xpose.msra.mxu0 0
    %665 = vmatprep.subr.bf16.mxu0 0
    %666 = vmatpush1.bf16.xpose.msra.mxu0 0
    %667 = vmatprep.subr.bf16.mxu0 0
    %668 = vmatpush1.bf16.xpose.msra.mxu0 0
    %669 = vmatprep.subr.bf16.mxu0 0
    %670 = vmatpush1.bf16.xpose.msra.mxu0 0
    %671 = vmatprep.subr.bf16.mxu0 0
    %672 = vmatpush1.bf16.xpose.msra.mxu0 0
    %673 = vmatprep.subr.bf16.mxu0 0
    %674 = vmatpush1.bf16.xpose.msra.mxu0 0
    %675 = vmatprep.subr.bf16.mxu0 0
    %676 = vmatpush1.bf16.xpose.msra.mxu0 0
    %677 = vmatprep.subr.bf16.mxu0 0
    %678 = vmatpush1.bf16.xpose.msra.mxu0 0
    %679 = vmatprep.subr.bf16.mxu0 0
    %680 = vmatpush1.bf16.xpose.msra.mxu0 0
    %681 = vmatprep.subr.bf16.mxu0 0
    %682 = vmatpush1.bf16.xpose.msra.mxu0 0
    %683 = vmatprep.subr.bf16.mxu0 0
    %684 = vmatpush1.bf16.xpose.msra.mxu0 0
    %685 = vmatprep.mubr.bf16.mxu0 0
    %686 = vmatmul.mubr.bf16.gmra.mrb[0].mxu0 %v648
    %v687 = vpop.f32.mrb[0].mxu0
    %v688 = vadd.f32 %v198, %v687
    %v689 = vpop.f32.mrb[0].mxu0
    %v690 = vpop.f32.mrb[0].mxu0
    %v691 = vpop.f32.mrb[0].mxu0
    %692 = vdwg.mxu0
    %693 = vrot.lane.b32.xlu0 %v192, 112
    %v694 = vpop.permute.xlu0 %693
    %695 = vrot.lane.b32.xlu0 %v192, 80
    %v696 = vpop.permute.xlu0 %695
    %v698 = vsel %vm207, %v694, 0
    %v701 = vsel %vm207, %v696, 0
    %703 = vmatprep.subr.bf16.mxu0 0
    %704 = vmatpush1.bf16.xpose.msra.mxu0 %v701
    %705 = vmatprep.subr.bf16.mxu0 0
    %706 = vmatpush1.bf16.xpose.msra.mxu0 0
    %707 = vmatprep.subr.bf16.mxu0 0
    %708 = vmatpush1.bf16.xpose.msra.mxu0 0
    %709 = vmatprep.subr.bf16.mxu0 0
    %710 = vmatpush1.bf16.xpose.msra.mxu0 0
    %711 = vmatprep.subr.bf16.mxu0 0
    %712 = vmatpush1.bf16.xpose.msra.mxu0 0
    %713 = vmatprep.subr.bf16.mxu0 0
    %714 = vmatpush1.bf16.xpose.msra.mxu0 0
    %715 = vmatprep.subr.bf16.mxu0 0
    %716 = vmatpush1.bf16.xpose.msra.mxu0 0
    %717 = vmatprep.subr.bf16.mxu0 0
    %718 = vmatpush1.bf16.xpose.msra.mxu0 0
    %719 = vmatprep.subr.bf16.mxu0 0
    %720 = vmatpush1.bf16.xpose.msra.mxu0 0
    %721 = vmatprep.subr.bf16.mxu0 0
    %722 = vmatpush1.bf16.xpose.msra.mxu0 0
    %723 = vmatprep.subr.bf16.mxu0 0
    %724 = vmatpush1.bf16.xpose.msra.mxu0 0
    %725 = vmatprep.subr.bf16.mxu0 0
    %726 = vmatpush1.bf16.xpose.msra.mxu0 0
    %727 = vmatprep.subr.bf16.mxu0 0
    %728 = vmatpush1.bf16.xpose.msra.mxu0 0
    %729 = vmatprep.subr.bf16.mxu0 0
    %730 = vmatpush1.bf16.xpose.msra.mxu0 0
    %731 = vmatprep.subr.bf16.mxu0 0
    %732 = vmatpush1.bf16.xpose.msra.mxu0 0
    %733 = vmatprep.subr.bf16.mxu0 0
    %734 = vmatpush1.bf16.xpose.msra.mxu0 0
    %735 = vmatprep.mubr.bf16.mxu0 0
    %736 = vmatmul.mubr.bf16.gmra.mrb[0].mxu0 %v698
    %v737 = vpop.f32.mrb[0].mxu0
    %v738 = vadd.f32 %v202, %v737
    %v739 = vpop.f32.mrb[0].mxu0
    %v740 = vpop.f32.mrb[0].mxu0
    %v741 = vpop.f32.mrb[0].mxu0
    %742 = vdwg.mxu0
    %v743 = vsel %vm207, %v688, -inf
    %744 = vmax.xlane.f32.xlu0 %v743
    %v745 = vpop.xlane.xlu0 %744
    %v746 = vsel %vm207, %v738, -inf
    %747 = vmax.xlane.f32.xlu0 %v746
    %v748 = vpop.xlane.xlu0 %747
    %v749 = vsub.f32 %v688, %v745
    %v750 = vsub.f32 %v738, %v748
    %v751 = vmul.f32 %v749, 1.442695
    %v752 = vpow.pop %v751
    %v753 = vmul.f32 %v750, 1.442695
    %v754 = vpow.pop %v753
    %v755 = vsel %vm207, %v752, 0.0
    %756 = vadd.xlane.f32.xlu0 %v755
    %v757 = vpop.xlane.xlu0 %756
    %v758 = vsel %vm207, %v754, 0.0
    %759 = vadd.xlane.f32.xlu0 %v758
    %v760 = vpop.xlane.xlu0 %759
    %v761 = vrcp.pop %v757
    %v762 = vrcp.pop %v760
    %v763 = vmul.f32 %v752, %v761
    %v764 = vmul.f32 %v754, %v762
    %v765 = vpack.c.bf16 %v763, %v763
    %v766 = vpack.c.bf16 %v764, %v764
    %767 = vrot.lane.b32.xlu0 %v191, 48
    %v768 = vpop.permute.xlu0 %767
    %v770 = vsel %vm207, %v765, 0
    %v773 = vsel %vm331, %v768, 0
    %775 = vmatprep.subr.bf16.mxu0 0
    %776 = vmatpush1.bf16.msra.mxu0 %v773
    %777 = vmatprep.subr.bf16.mxu0 0
    %778 = vmatpush1.bf16.msra.mxu0 0
    %779 = vmatprep.subr.bf16.mxu0 0
    %780 = vmatpush1.bf16.msra.mxu0 0
    %781 = vmatprep.subr.bf16.mxu0 0
    %782 = vmatpush1.bf16.msra.mxu0 0
    %783 = vmatprep.subr.bf16.mxu0 0
    %784 = vmatpush1.bf16.msra.mxu0 0
    %785 = vmatprep.subr.bf16.mxu0 0
    %786 = vmatpush1.bf16.msra.mxu0 0
    %787 = vmatprep.subr.bf16.mxu0 0
    %788 = vmatpush1.bf16.msra.mxu0 0
    %789 = vmatprep.subr.bf16.mxu0 0
    %790 = vmatpush1.bf16.msra.mxu0 0
    %791 = vmatprep.subr.bf16.mxu0 0
    %792 = vmatpush1.bf16.msra.mxu0 0
    %793 = vmatprep.subr.bf16.mxu0 0
    %794 = vmatpush1.bf16.msra.mxu0 0
    %795 = vmatprep.subr.bf16.mxu0 0
    %796 = vmatpush1.bf16.msra.mxu0 0
    %797 = vmatprep.subr.bf16.mxu0 0
    %798 = vmatpush1.bf16.msra.mxu0 0
    %799 = vmatprep.subr.bf16.mxu0 0
    %800 = vmatpush1.bf16.msra.mxu0 0
    %801 = vmatprep.subr.bf16.mxu0 0
    %802 = vmatpush1.bf16.msra.mxu0 0
    %803 = vmatprep.subr.bf16.mxu0 0
    %804 = vmatpush1.bf16.msra.mxu0 0
    %805 = vmatprep.subr.bf16.mxu0 0
    %806 = vmatpush1.bf16.msra.mxu0 0
    %807 = vmatprep.mubr.bf16.mxu0 0
    %808 = vmatmul.mubr.bf16.gmra.mrb[0].mxu0 %v770
    %v809 = vpop.f32.mrb[0].mxu0
    %v810 = vadd.f32 0.0, %v809
    %v811 = vpop.f32.mrb[0].mxu0
    %v812 = vpop.f32.mrb[0].mxu0
    %v813 = vpop.f32.mrb[0].mxu0
    %814 = vdwg.mxu0
    %815 = vrot.lane.b32.xlu0 %v192, 48
    %v816 = vpop.permute.xlu0 %815
    %v818 = vsel %vm207, %v766, 0
    %v821 = vsel %vm331, %v816, 0
    %823 = vmatprep.subr.bf16.mxu0 0
    %824 = vmatpush1.bf16.msra.mxu0 %v821
    %825 = vmatprep.subr.bf16.mxu0 0
    %826 = vmatpush1.bf16.msra.mxu0 0
    %827 = vmatprep.subr.bf16.mxu0 0
    %828 = vmatpush1.bf16.msra.mxu0 0
    %829 = vmatprep.subr.bf16.mxu0 0
    %830 = vmatpush1.bf16.msra.mxu0 0
    %831 = vmatprep.subr.bf16.mxu0 0
    %832 = vmatpush1.bf16.msra.mxu0 0
    %833 = vmatprep.subr.bf16.mxu0 0
    %834 = vmatpush1.bf16.msra.mxu0 0
    %835 = vmatprep.subr.bf16.mxu0 0
    %836 = vmatpush1.bf16.msra.mxu0 0
    %837 = vmatprep.subr.bf16.mxu0 0
    %838 = vmatpush1.bf16.msra.mxu0 0
    %839 = vmatprep.subr.bf16.mxu0 0
    %840 = vmatpush1.bf16.msra.mxu0 0
    %841 = vmatprep.subr.bf16.mxu0 0
    %842 = vmatpush1.bf16.msra.mxu0 0
    %843 = vmatprep.subr.bf16.mxu0 0
    %844 = vmatpush1.bf16.msra.mxu0 0
    %845 = vmatprep.subr.bf16.mxu0 0
    %846 = vmatpush1.bf16.msra.mxu0 0
    %847 = vmatprep.subr.bf16.mxu0 0
    %848 = vmatpush1.bf16.msra.mxu0 0
    %849 = vmatprep.subr.bf16.mxu0 0
    %850 = vmatpush1.bf16.msra.mxu0 0
    %851 = vmatprep.subr.bf16.mxu0 0
    %852 = vmatpush1.bf16.msra.mxu0 0
    %853 = vmatprep.subr.bf16.mxu0 0
    %854 = vmatpush1.bf16.msra.mxu0 0
    %855 = vmatprep.mubr.bf16.mxu0 0
    %856 = vmatmul.mubr.bf16.gmra.mrb[0].mxu0 %v818
    %v857 = vpop.f32.mrb[0].mxu0
    %v858 = vadd.f32 0.0, %v857
    %v859 = vpop.f32.mrb[0].mxu0
    %v860 = vpop.f32.mrb[0].mxu0
    %v861 = vpop.f32.mrb[0].mxu0
    %862 = vdwg.mxu0
    %863 = vrot.lane.b32.xlu0 %v191, 104
    %v864 = vpop.permute.xlu0 %863
    %865 = vrot.lane.b32.xlu0 %v191, 72
    %v866 = vpop.permute.xlu0 %865
    %v868 = vsel %vm207, %v864, 0
    %v871 = vsel %vm207, %v866, 0
    %873 = vmatprep.subr.bf16.mxu0 0
    %874 = vmatpush1.bf16.xpose.msra.mxu0 %v871
    %875 = vmatprep.subr.bf16.mxu0 0
    %876 = vmatpush1.bf16.xpose.msra.mxu0 0
    %877 = vmatprep.subr.bf16.mxu0 0
    %878 = vmatpush1.bf16.xpose.msra.mxu0 0
    %879 = vmatprep.subr.bf16.mxu0 0
    %880 = vmatpush1.bf16.xpose.msra.mxu0 0
    %881 = vmatprep.subr.bf16.mxu0 0
    %882 = vmatpush1.bf16.xpose.msra.mxu0 0
    %883 = vmatprep.subr.bf16.mxu0 0
    %884 = vmatpush1.bf16.xpose.msra.mxu0 0
    %885 = vmatprep.subr.bf16.mxu0 0
    %886 = vmatpush1.bf16.xpose.msra.mxu0 0
    %887 = vmatprep.subr.bf16.mxu0 0
    %888 = vmatpush1.bf16.xpose.msra.mxu0 0
    %889 = vmatprep.subr.bf16.mxu0 0
    %890 = vmatpush1.bf16.xpose.msra.mxu0 0
    %891 = vmatprep.subr.bf16.mxu0 0
    %892 = vmatpush1.bf16.xpose.msra.mxu0 0
    %893 = vmatprep.subr.bf16.mxu0 0
    %894 = vmatpush1.bf16.xpose.msra.mxu0 0
    %895 = vmatprep.subr.bf16.mxu0 0
    %896 = vmatpush1.bf16.xpose.msra.mxu0 0
    %897 = vmatprep.subr.bf16.mxu0 0
    %898 = vmatpush1.bf16.xpose.msra.mxu0 0
    %899 = vmatprep.subr.bf16.mxu0 0
    %900 = vmatpush1.bf16.xpose.msra.mxu0 0
    %901 = vmatprep.subr.bf16.mxu0 0
    %902 = vmatpush1.bf16.xpose.msra.mxu0 0
    %903 = vmatprep.subr.bf16.mxu0 0
    %904 = vmatpush1.bf16.xpose.msra.mxu0 0
    %905 = vmatprep.mubr.bf16.mxu0 0
    %906 = vmatmul.mubr.bf16.gmra.mrb[0].mxu0 %v868
    %v907 = vpop.f32.mrb[0].mxu0
    %v908 = vadd.f32 %v198, %v907
    %v909 = vpop.f32.mrb[0].mxu0
    %v910 = vpop.f32.mrb[0].mxu0
    %v911 = vpop.f32.mrb[0].mxu0
    %912 = vdwg.mxu0
    %913 = vrot.lane.b32.xlu0 %v192, 104
    %v914 = vpop.permute.xlu0 %913
    %915 = vrot.lane.b32.xlu0 %v192, 72
    %v916 = vpop.permute.xlu0 %915
    %v918 = vsel %vm207, %v914, 0
    %v921 = vsel %vm207, %v916, 0
    %923 = vmatprep.subr.bf16.mxu0 0
    %924 = vmatpush1.bf16.xpose.msra.mxu0 %v921
    %925 = vmatprep.subr.bf16.mxu0 0
    %926 = vmatpush1.bf16.xpose.msra.mxu0 0
    %927 = vmatprep.subr.bf16.mxu0 0
    %928 = vmatpush1.bf16.xpose.msra.mxu0 0
    %929 = vmatprep.subr.bf16.mxu0 0
    %930 = vmatpush1.bf16.xpose.msra.mxu0 0
    %931 = vmatprep.subr.bf16.mxu0 0
    %932 = vmatpush1.bf16.xpose.msra.mxu0 0
    %933 = vmatprep.subr.bf16.mxu0 0
    %934 = vmatpush1.bf16.xpose.msra.mxu0 0
    %935 = vmatprep.subr.bf16.mxu0 0
    %936 = vmatpush1.bf16.xpose.msra.mxu0 0
    %937 = vmatprep.subr.bf16.mxu0 0
    %938 = vmatpush1.bf16.xpose.msra.mxu0 0
    %939 = vmatprep.subr.bf16.mxu0 0
    %940 = vmatpush1.bf16.xpose.msra.mxu0 0
    %941 = vmatprep.subr.bf16.mxu0 0
    %942 = vmatpush1.bf16.xpose.msra.mxu0 0
    %943 = vmatprep.subr.bf16.mxu0 0
    %944 = vmatpush1.bf16.xpose.msra.mxu0 0
    %945 = vmatprep.subr.bf16.mxu0 0
    %946 = vmatpush1.bf16.xpose.msra.mxu0 0
    %947 = vmatprep.subr.bf16.mxu0 0
    %948 = vmatpush1.bf16.xpose.msra.mxu0 0
    %949 = vmatprep.subr.bf16.mxu0 0
    %950 = vmatpush1.bf16.xpose.msra.mxu0 0
    %951 = vmatprep.subr.bf16.mxu0 0
    %952 = vmatpush1.bf16.xpose.msra.mxu0 0
    %953 = vmatprep.subr.bf16.mxu0 0
    %954 = vmatpush1.bf16.xpose.msra.mxu0 0
    %955 = vmatprep.mubr.bf16.mxu0 0
    %956 = vmatmul.mubr.bf16.gmra.mrb[0].mxu0 %v918
    %v957 = vpop.f32.mrb[0].mxu0
    %v958 = vadd.f32 %v202, %v957
    %v959 = vpop.f32.mrb[0].mxu0
    %v960 = vpop.f32.mrb[0].mxu0
    %v961 = vpop.f32.mrb[0].mxu0
    %962 = vdwg.mxu0
    %v963 = vsel %vm207, %v908, -inf
    %964 = vmax.xlane.f32.xlu0 %v963
    %v965 = vpop.xlane.xlu0 %964
    %v966 = vsel %vm207, %v958, -inf
    %967 = vmax.xlane.f32.xlu0 %v966
    %v968 = vpop.xlane.xlu0 %967
    %v969 = vsub.f32 %v908, %v965
    %v970 = vsub.f32 %v958, %v968
    %v971 = vmul.f32 %v969, 1.442695
    %v972 = vpow.pop %v971
    %v973 = vmul.f32 %v970, 1.442695
    %v974 = vpow.pop %v973
    %v975 = vsel %vm207, %v972, 0.0
    %976 = vadd.xlane.f32.xlu0 %v975
    %v977 = vpop.xlane.xlu0 %976
    %v978 = vsel %vm207, %v974, 0.0
    %979 = vadd.xlane.f32.xlu0 %v978
    %v980 = vpop.xlane.xlu0 %979
    %v981 = vrcp.pop %v977
    %v982 = vrcp.pop %v980
    %v983 = vmul.f32 %v972, %v981
    %v984 = vmul.f32 %v974, %v982
    %v985 = vpack.c.bf16 %v983, %v983
    %v986 = vpack.c.bf16 %v984, %v984
    %987 = vrot.lane.b32.xlu0 %v191, 40
    %v988 = vpop.permute.xlu0 %987
    %v990 = vsel %vm207, %v985, 0
    %v993 = vsel %vm331, %v988, 0
    %995 = vmatprep.subr.bf16.mxu0 0
    %996 = vmatpush1.bf16.msra.mxu0 %v993
    %997 = vmatprep.subr.bf16.mxu0 0
    %998 = vmatpush1.bf16.msra.mxu0 0
    %999 = vmatprep.subr.bf16.mxu0 0
    %1000 = vmatpush1.bf16.msra.mxu0 0
    %1001 = vmatprep.subr.bf16.mxu0 0
    %1002 = vmatpush1.bf16.msra.mxu0 0
    %1003 = vmatprep.subr.bf16.mxu0 0
    %1004 = vmatpush1.bf16.msra.mxu0 0
    %1005 = vmatprep.subr.bf16.mxu0 0
    %1006 = vmatpush1.bf16.msra.mxu0 0
    %1007 = vmatprep.subr.bf16.mxu0 0
    %1008 = vmatpush1.bf16.msra.mxu0 0
    %1009 = vmatprep.subr.bf16.mxu0 0
    %1010 = vmatpush1.bf16.msra.mxu0 0
    %1011 = vmatprep.subr.bf16.mxu0 0
    %1012 = vmatpush1.bf16.msra.mxu0 0
    %1013 = vmatprep.subr.bf16.mxu0 0
    %1014 = vmatpush1.bf16.msra.mxu0 0
    %1015 = vmatprep.subr.bf16.mxu0 0
    %1016 = vmatpush1.bf16.msra.mxu0 0
    %1017 = vmatprep.subr.bf16.mxu0 0
    %1018 = vmatpush1.bf16.msra.mxu0 0
    %1019 = vmatprep.subr.bf16.mxu0 0
    %1020 = vmatpush1.bf16.msra.mxu0 0
    %1021 = vmatprep.subr.bf16.mxu0 0
    %1022 = vmatpush1.bf16.msra.mxu0 0
    %1023 = vmatprep.subr.bf16.mxu0 0
    %1024 = vmatpush1.bf16.msra.mxu0 0
    %1025 = vmatprep.subr.bf16.mxu0 0
    %1026 = vmatpush1.bf16.msra.mxu0 0
    %1027 = vmatprep.mubr.bf16.mxu0 0
    %1028 = vmatmul.mubr.bf16.gmra.mrb[0].mxu0 %v990
    %v1029 = vpop.f32.mrb[0].mxu0
    %v1030 = vadd.f32 0.0, %v1029
    %v1031 = vpop.f32.mrb[0].mxu0
    %v1032 = vpop.f32.mrb[0].mxu0
    %v1033 = vpop.f32.mrb[0].mxu0
    %1034 = vdwg.mxu0
    %1035 = vrot.lane.b32.xlu0 %v192, 40
    %v1036 = vpop.permute.xlu0 %1035
    %v1038 = vsel %vm207, %v986, 0
    %v1041 = vsel %vm331, %v1036, 0
    %1043 = vmatprep.subr.bf16.mxu0 0
    %1044 = vmatpush1.bf16.msra.mxu0 %v1041
    %1045 = vmatprep.subr.bf16.mxu0 0
    %1046 = vmatpush1.bf16.msra.mxu0 0
    %1047 = vmatprep.subr.bf16.mxu0 0
    %1048 = vmatpush1.bf16.msra.mxu0 0
    %1049 = vmatprep.subr.bf16.mxu0 0
    %1050 = vmatpush1.bf16.msra.mxu0 0
    %1051 = vmatprep.subr.bf16.mxu0 0
    %1052 = vmatpush1.bf16.msra.mxu0 0
    %1053 = vmatprep.subr.bf16.mxu0 0
    %1054 = vmatpush1.bf16.msra.mxu0 0
    %1055 = vmatprep.subr.bf16.mxu0 0
    %1056 = vmatpush1.bf16.msra.mxu0 0
    %1057 = vmatprep.subr.bf16.mxu0 0
    %1058 = vmatpush1.bf16.msra.mxu0 0
    %1059 = vmatprep.subr.bf16.mxu0 0
    %1060 = vmatpush1.bf16.msra.mxu0 0
    %1061 = vmatprep.subr.bf16.mxu0 0
    %1062 = vmatpush1.bf16.msra.mxu0 0
    %1063 = vmatprep.subr.bf16.mxu0 0
    %1064 = vmatpush1.bf16.msra.mxu0 0
    %1065 = vmatprep.subr.bf16.mxu0 0
    %1066 = vmatpush1.bf16.msra.mxu0 0
    %1067 = vmatprep.subr.bf16.mxu0 0
    %1068 = vmatpush1.bf16.msra.mxu0 0
    %1069 = vmatprep.subr.bf16.mxu0 0
    %1070 = vmatpush1.bf16.msra.mxu0 0
    %1071 = vmatprep.subr.bf16.mxu0 0
    %1072 = vmatpush1.bf16.msra.mxu0 0
    %1073 = vmatprep.subr.bf16.mxu0 0
    %1074 = vmatpush1.bf16.msra.mxu0 0
    %1075 = vmatprep.mubr.bf16.mxu0 0
    %1076 = vmatmul.mubr.bf16.gmra.mrb[0].mxu0 %v1038
    %v1077 = vpop.f32.mrb[0].mxu0
    %v1078 = vadd.f32 0.0, %v1077
    %v1079 = vpop.f32.mrb[0].mxu0
    %v1080 = vpop.f32.mrb[0].mxu0
    %v1081 = vpop.f32.mrb[0].mxu0
    %1082 = vdwg.mxu0
    %1085 = vrot.lane.b32.xlu0 %v590, 8
    %v1086 = vpop.permute.xlu0 %1085
    %1087 = vrot.lane.b32.xlu0 %v638, 8
    %v1088 = vpop.permute.xlu0 %1087
    %1093 = vrot.lane.b32.xlu0 %v810, 16
    %v1094 = vpop.permute.xlu0 %1093
    %1095 = vrot.lane.b32.xlu0 %v858, 16
    %v1096 = vpop.permute.xlu0 %1095
    %1101 = vrot.lane.b32.xlu0 %v1030, 24
    %v1102 = vpop.permute.xlu0 %1101
    %1103 = vrot.lane.b32.xlu0 %v1078, 24
    %v1104 = vpop.permute.xlu0 %1103
    %v1107 = vsel %vm207, %v370, %v1086
    %v1108 = vsel %vm207, %v418, %v1088
    %vm1109 = vcmask 130048
    %v1110 = vsel %vm1109, %v1107, %v1094
    %v1111 = vsel %vm1109, %v1108, %v1096
    %vm1112 = vcmask 195584
    %v1113 = vsel %vm1112, %v1110, %v1102
    %v1114 = vsel %vm1112, %v1111, %v1104
    %v1115 = vpack.c.bf16 %v1114, %v1113
    %v1116 = vld [vmem:[#allocation7] sm:$0xf]
    %v1117 = vld [vmem:[#allocation7 + $0x4] sm:$0xf]
    %v1118 = vld [vmem:[#allocation7 + $0x8] sm:$0xf]
    %v1119 = vld [vmem:[#allocation7 + $0xc] sm:$0xf]
    %v1120 = vld [vmem:[%s5] sm:$0x1]
    %v1122 = vlaneseq
    %v1123 = vshrl.u32 %v1122, 7
    %v1124 = vsub.s32 0, %v1123
    %v1125 = vrot.slane %v1120, %v1124
    %v1131 = vunpack.c.l.b16 %v1116
    %v1132 = vunpack.c.l.b16 %v1117
    %v1133 = vunpack.c.l.b16 %v1118
    %v1134 = vunpack.c.l.b16 %v1119
    %v1135 = vpack.c.b16 %v1132, %v1131
    %v1136 = vpack.c.b16 %v1134, %v1133
    %v1140 = vsel %vm142, %v1115, 0
    %1142 = vmatprep.subr.bf16.mxu0 0
    %1143 = vmatpush1.bf16.msra.mxu0 %v1135
    %1144 = vmatprep.subr.bf16.mxu0 0
    %1145 = vmatpush1.bf16.msra.mxu0 %v1136
    %1146 = vmatprep.subr.bf16.mxu0 0
    %1147 = vmatpush1.bf16.msra.mxu0 0
    %1148 = vmatprep.subr.bf16.mxu0 0
    %1149 = vmatpush1.bf16.msra.mxu0 0
    %1150 = vmatprep.subr.bf16.mxu0 0
    %1151 = vmatpush1.bf16.msra.mxu0 0
    %1152 = vmatprep.subr.bf16.mxu0 0
    %1153 = vmatpush1.bf16.msra.mxu0 0
    %1154 = vmatprep.subr.bf16.mxu0 0
    %1155 = vmatpush1.bf16.msra.mxu0 0
    %1156 = vmatprep.subr.bf16.mxu0 0
    %1157 = vmatpush1.bf16.msra.mxu0 0
    %1158 = vmatprep.subr.bf16.mxu0 0
    %1159 = vmatpush1.bf16.msra.mxu0 0
    %1160 = vmatprep.subr.bf16.mxu0 0
    %1161 = vmatpush1.bf16.msra.mxu0 0
    %1162 = vmatprep.subr.bf16.mxu0 0
    %1163 = vmatpush1.bf16.msra.mxu0 0
    %1164 = vmatprep.subr.bf16.mxu0 0
    %1165 = vmatpush1.bf16.msra.mxu0 0
    %1166 = vmatprep.subr.bf16.mxu0 0
    %1167 = vmatpush1.bf16.msra.mxu0 0
    %1168 = vmatprep.subr.bf16.mxu0 0
    %1169 = vmatpush1.bf16.msra.mxu0 0
    %1170 = vmatprep.subr.bf16.mxu0 0
    %1171 = vmatpush1.bf16.msra.mxu0 0
    %1172 = vmatprep.subr.bf16.mxu0 0
    %1173 = vmatpush1.bf16.msra.mxu0 0
    %1174 = vmatprep.mubr.bf16.mxu0 0
    %1175 = vmatmul.mubr.bf16.gmra.mrb[0].mxu0 %v1140
    %v1176 = vpop.f32.mrb[0].mxu0
    %v1177 = vadd.f32 %v1125, %v1176
    %v1178 = vpop.f32.mrb[0].mxu0
    %v1179 = vpop.f32.mrb[0].mxu0
    %v1180 = vadd.f32 %v1125, %v1179
    %v1181 = vpop.f32.mrb[0].mxu0
    %1182 = vdwg.mxu0
    %v1183 = vunpack.c.l.bf16 %v112
    %v1184 = vunpack.c.l.bf16 %v113
    %v1185 = vadd.f32 %v1183, %v1177
    %v1186 = vadd.f32 %v1184, %v1180
    %v1187 = vld [vmem:[%s10] sm:$0x1]
    %v1188 = vld [vmem:[%s11] sm:$0x1]
    %v1189 = vsel %vm142, %v1185, 0.0
    %1190 = vadd.xlane.f32.xlu0 %v1189
    %v1191 = vpop.xlane.xlu0 %1190
    %v1192 = vsel %vm142, %v1186, 0.0
    %1193 = vadd.xlane.f32.xlu0 %v1192
    %v1194 = vpop.xlane.xlu0 %1193
    %v1195 = vrcp.pop 32.0
    %v1196 = vmul.f32 %v1191, %v1195
    %v1197 = vmul.f32 %v1194, %v1195
    %v1198 = vsub.f32 %v1185, %v1196
    %v1199 = vsub.f32 %v1186, %v1197
    %v1200 = vmul.f32 %v1198, %v1198
    %v1201 = vmul.f32 %v1199, %v1199
    %v1202 = vsel %vm142, %v1200, 0.0
    %1203 = vadd.xlane.f32.xlu0 %v1202
    %v1204 = vpop.xlane.xlu0 %1203
    %v1205 = vsel %vm142, %v1201, 0.0
    %1206 = vadd.xlane.f32.xlu0 %v1205
    %v1207 = vpop.xlane.xlu0 %1206
    %v1208 = vmul.f32 %v1204, %v1195
    %v1209 = vmul.f32 %v1207, %v1195
    %v1210 = vadd.f32 %v1208, 1e-06
    %v1211 = vadd.f32 %v1209, 1e-06
    %v1212 = vrsqrt.pop %v1210
    %v1213 = vrsqrt.pop %v1211
    %v1214 = vmul.f32 %v1198, %v1212
    %v1215 = vmul.f32 %v1199, %v1213
    %v1217 = vlaneseq
    %v1218 = vshrl.u32 %v1217, 7
    %v1219 = vsub.s32 0, %v1218
    %v1220 = vrot.slane %v1187, %v1219
    %v1222 = vmul.f32 %v1214, %v1220
    %v1223 = vmul.f32 %v1215, %v1220
    %v1225 = vlaneseq
    %v1226 = vshrl.u32 %v1225, 7
    %v1227 = vsub.s32 0, %v1226
    %v1228 = vrot.slane %v1188, %v1227
    %v1230 = vadd.f32 %v1222, %v1228
    %v1231 = vadd.f32 %v1223, %v1228
    %v1232 = vpack.c.bf16 %v1231, %v1230
    %v1233 = vld [vmem:[%s6] sm:$0xf]
    %v1234 = vld [vmem:[%s6 + $0x4] sm:$0xf]
    %v1235 = vld [vmem:[%s6 + $0x8] sm:$0xf]
    %v1236 = vld [vmem:[%s6 + $0xc] sm:$0xf]
    %v1237 = vld [vmem:[%s7] sm:$0x1]
    %v1239 = vlaneseq
    %v1240 = vshrl.u32 %v1239, 7
    %v1241 = vsub.s32 0, %v1240
    %v1242 = vrot.slane %v1237, %v1241
    %v1248 = vunpack.c.l.b16 %v1233
    %v1249 = vunpack.c.l.b16 %v1234
    %v1250 = vunpack.c.l.b16 %v1235
    %v1251 = vunpack.c.l.b16 %v1236
    %v1252 = vpack.c.b16 %v1249, %v1248
    %v1253 = vpack.c.b16 %v1251, %v1250
    %v1257 = vsel %vm142, %v1232, 0
    %1259 = vmatprep.subr.bf16.mxu0 0
    %1260 = vmatpush1.bf16.msra.mxu0 %v1252
    %1261 = vmatprep.subr.bf16.mxu0 0
    %1262 = vmatpush1.bf16.msra.mxu0 %v1253
    %1263 = vmatprep.subr.bf16.mxu0 0
    %1264 = vmatpush1.bf16.msra.mxu0 0
    %1265 = vmatprep.subr.bf16.mxu0 0
    %1266 = vmatpush1.bf16.msra.mxu0 0
    %1267 = vmatprep.subr.bf16.mxu0 0
    %1268 = vmatpush1.bf16.msra.mxu0 0
    %1269 = vmatprep.subr.bf16.mxu0 0
    %1270 = vmatpush1.bf16.msra.mxu0 0
    %1271 = vmatprep.subr.bf16.mxu0 0
    %1272 = vmatpush1.bf16.msra.mxu0 0
    %1273 = vmatprep.subr.bf16.mxu0 0
    %1274 = vmatpush1.bf16.msra.mxu0 0
    %1275 = vmatprep.subr.bf16.mxu0 0
    %1276 = vmatpush1.bf16.msra.mxu0 0
    %1277 = vmatprep.subr.bf16.mxu0 0
    %1278 = vmatpush1.bf16.msra.mxu0 0
    %1279 = vmatprep.subr.bf16.mxu0 0
    %1280 = vmatpush1.bf16.msra.mxu0 0
    %1281 = vmatprep.subr.bf16.mxu0 0
    %1282 = vmatpush1.bf16.msra.mxu0 0
    %1283 = vmatprep.subr.bf16.mxu0 0
    %1284 = vmatpush1.bf16.msra.mxu0 0
    %1285 = vmatprep.subr.bf16.mxu0 0
    %1286 = vmatpush1.bf16.msra.mxu0 0
    %1287 = vmatprep.subr.bf16.mxu0 0
    %1288 = vmatpush1.bf16.msra.mxu0 0
    %1289 = vmatprep.subr.bf16.mxu0 0
    %1290 = vmatpush1.bf16.msra.mxu0 0
    %1291 = vmatprep.mubr.bf16.mxu0 0
    %1292 = vmatmul.mubr.bf16.gmra.mrb[0].mxu0 %v1257
    %v1293 = vpop.f32.mrb[0].mxu0
    %v1294 = vadd.f32 %v1242, %v1293
    %v1295 = vpop.f32.mrb[0].mxu0
    %v1296 = vpop.f32.mrb[0].mxu0
    %v1297 = vadd.f32 %v1242, %v1296
    %v1298 = vpop.f32.mrb[0].mxu0
    %1299 = vdwg.mxu0
    %v1300 = vmul.f32 %v1294, 0.5
    %v1301 = vmul.f32 %v1297, 0.5
    %v1302 = vmul.f32 %v1294, 0.044715
    %v1303 = vmul.f32 %v1297, 0.044715
    %v1304 = vmul.f32 %v1302, %v1294
    %v1305 = vmul.f32 %v1303, %v1297
    %v1306 = vmul.f32 %v1304, %v1294
    %v1307 = vmul.f32 %v1305, %v1297
    %v1308 = vadd.f32 %v1294, %v1306
    %v1309 = vadd.f32 %v1297, %v1307
    %v1310 = vmul.f32 %v1308, 0.7978846
    %v1311 = vmul.f32 %v1309, 0.7978846
    %v1312 = vtanh.pop %v1310
    %v1313 = vtanh.pop %v1311
    %v1314 = vadd.f32 %v1312, 1.0
    %v1315 = vadd.f32 %v1313, 1.0
    %v1316 = vmul.f32 %v1300, %v1314
    %v1317 = vmul.f32 %v1301, %v1315
    %v1318 = vpack.c.bf16 %v1317, %v1316
    %v1319 = vld [vmem:[#allocation8] sm:$0xf]
    %v1320 = vld [vmem:[#allocation8 + $0x4] sm:$0xf]
    %v1321 = vld [vmem:[#allocation8 + $0x8] sm:$0xf]
    %v1322 = vld [vmem:[#allocation8 + $0xc] sm:$0xf]
    %v1323 = vld [vmem:[%s9] sm:$0x1]
    %v1325 = vlaneseq
    %v1326 = vshrl.u32 %v1325, 7
    %v1327 = vsub.s32 0, %v1326
    %v1328 = vrot.slane %v1323, %v1327
    %v1334 = vunpack.c.l.b16 %v1319
    %v1335 = vunpack.c.l.b16 %v1320
    %v1336 = vunpack.c.l.b16 %v1321
    %v1337 = vunpack.c.l.b16 %v1322
    %v1338 = vpack.c.b16 %v1335, %v1334
    %v1339 = vpack.c.b16 %v1337, %v1336
    %v1343 = vsel %vm142, %v1318, 0
    %1345 = vmatprep.subr.bf16.mxu0 0
    %1346 = vmatpush1.bf16.msra.mxu0 %v1338
    %1347 = vmatprep.subr.bf16.mxu0 0
    %1348 = vmatpush1.bf16.msra.mxu0 %v1339
    %1349 = vmatprep.subr.bf16.mxu0 0
    %1350 = vmatpush1.bf16.msra.mxu0 0
    %1351 = vmatprep.subr.bf16.mxu0 0
    %1352 = vmatpush1.bf16.msra.mxu0 0
    %1353 = vmatprep.subr.bf16.mxu0 0
    %1354 = vmatpush1.bf16.msra.mxu0 0
    %1355 = vmatprep.subr.bf16.mxu0 0
    %1356 = vmatpush1.bf16.msra.mxu0 0
    %1357 = vmatprep.subr.bf16.mxu0 0
    %1358 = vmatpush1.bf16.msra.mxu0 0
    %1359 = vmatprep.subr.bf16.mxu0 0
    %1360 = vmatpush1.bf16.msra.mxu0 0
    %1361 = vmatprep.subr.bf16.mxu0 0
    %1362 = vmatpush1.bf16.msra.mxu0 0
    %1363 = vmatprep.subr.bf16.mxu0 0
    %1364 = vmatpush1.bf16.msra.mxu0 0
    %1365 = vmatprep.subr.bf16.mxu0 0
    %1366 = vmatpush1.bf16.msra.mxu0 0
    %1367 = vmatprep.subr.bf16.mxu0 0
    %1368 = vmatpush1.bf16.msra.mxu0 0
    %1369 = vmatprep.subr.bf16.mxu0 0
    %1370 = vmatpush1.bf16.msra.mxu0 0
    %1371 = vmatprep.subr.bf16.mxu0 0
    %1372 = vmatpush1.bf16.msra.mxu0 0
    %1373 = vmatprep.subr.bf16.mxu0 0
    %1374 = vmatpush1.bf16.msra.mxu0 0
    %1375 = vmatprep.subr.bf16.mxu0 0
    %1376 = vmatpush1.bf16.msra.mxu0 0
    %1377 = vmatprep.mubr.bf16.mxu0 0
    %1378 = vmatmul.mubr.bf16.gmra.mrb[0].mxu0 %v1343
    %v1379 = vpop.f32.mrb[0].mxu0
    %v1380 = vadd.f32 %v1328, %v1379
    %v1381 = vpop.f32.mrb[0].mxu0
    %v1382 = vpop.f32.mrb[0].mxu0
    %v1383 = vadd.f32 %v1328, %v1382
    %v1384 = vpop.f32.mrb[0].mxu0
    %1385 = vdwg.mxu0
    %v1386 = vadd.f32 %v1230, %v1380
    %v1387 = vadd.f32 %v1231, %v1383
    %v1388 = vld [vmem:[%s12] sm:$0x1]
    %v1389 = vld [vmem:[%s13] sm:$0x1]
    %v1390 = vsel %vm142, %v1386, 0.0
    %1391 = vadd.xlane.f32.xlu0 %v1390
    %v1392 = vpop.xlane.xlu0 %1391
    %v1393 = vsel %vm142, %v1387, 0.0
    %1394 = vadd.xlane.f32.xlu0 %v1393
    %v1395 = vpop.xlane.xlu0 %1394
    %v1396 = vmul.f32 %v1392, %v1195
    %v1397 = vmul.f32 %v1395, %v1195
    %v1398 = vsub.f32 %v1386, %v1396
    %v1399 = vsub.f32 %v1387, %v1397
    %v1400 = vmul.f32 %v1398, %v1398
    %v1401 = vmul.f32 %v1399, %v1399
    %v1402 = vsel %vm142, %v1400, 0.0
    %1403 = vadd.xlane.f32.xlu0 %v1402
    %v1404 = vpop.xlane.xlu0 %1403
    %v1405 = vsel %vm142, %v1401, 0.0
    %1406 = vadd.xlane.f32.xlu0 %v1405
    %v1407 = vpop.xlane.xlu0 %1406
    %v1408 = vmul.f32 %v1404, %v1195
    %v1409 = vmul.f32 %v1407, %v1195
    %v1410 = vadd.f32 %v1408, 1e-06
    %v1411 = vadd.f32 %v1409, 1e-06
    %v1412 = vrsqrt.pop %v1410
    %v1413 = vrsqrt.pop %v1411
    %v1414 = vmul.f32 %v1398, %v1412
    %v1415 = vmul.f32 %v1399, %v1413
    %v1417 = vlaneseq
    %v1418 = vshrl.u32 %v1417, 7
    %v1419 = vsub.s32 0, %v1418
    %v1420 = vrot.slane %v1388, %v1419
    %v1422 = vmul.f32 %v1414, %v1420
    %v1423 = vmul.f32 %v1415, %v1420
    %v1425 = vlaneseq
    %v1426 = vshrl.u32 %v1425, 7
    %v1427 = vsub.s32 0, %v1426
    %v1428 = vrot.slane %v1389, %v1427
    %v1430 = vadd.f32 %v1422, %v1428
    %v1431 = vadd.f32 %v1423, %v1428
    %v1432 = vpack.c.bf16 %v1431, %v1430
    %v1434 = vunpack.c.l.b16 %v1432
    %v1435 = vunpack.c.h.b16 %v1432
    %v1436 = vpack.c.b16 %v1434, %v1434
    %v1437 = vpack.c.b16 %v1435, %v1435
    %vm1440 = vcmask 257024
    %1441 = vst.msk [vmem:[#allocation10] sm:$0xf] %vm1440, %v1436
    %1442 = vst.msk [vmem:[#allocation10 + $0x4] sm:$0xf] %vm1440, %v1437
    %v1443 = vld [vmem:[%s14] sm:$0x3]
    %v1445 = vsel %vm142, %v1443, 0
    %v1448 = vsel %vm142, %v1436, 0
    %1450 = vmatprep.subr.bf16.mxu0 0
    %1451 = vmatpush1.bf16.xpose.msra.mxu0 %v1448
    %1452 = vmatprep.subr.bf16.mxu0 0
    %1453 = vmatpush1.bf16.xpose.msra.mxu0 0
    %1454 = vmatprep.subr.bf16.mxu0 0
    %1455 = vmatpush1.bf16.xpose.msra.mxu0 0
    %1456 = vmatprep.subr.bf16.mxu0 0
    %1457 = vmatpush1.bf16.xpose.msra.mxu0 0
    %1458 = vmatprep.subr.bf16.mxu0 0
    %1459 = vmatpush1.bf16.xpose.msra.mxu0 0
    %1460 = vmatprep.subr.bf16.mxu0 0
    %1461 = vmatpush1.bf16.xpose.msra.mxu0 0
    %1462 = vmatprep.subr.bf16.mxu0 0
    %1463 = vmatpush1.bf16.xpose.msra.mxu0 0
    %1464 = vmatprep.subr.bf16.mxu0 0
    %1465 = vmatpush1.bf16.xpose.msra.mxu0 0
    %1466 = vmatprep.subr.bf16.mxu0 0
    %1467 = vmatpush1.bf16.xpose.msra.mxu0 0
    %1468 = vmatprep.subr.bf16.mxu0 0
    %1469 = vmatpush1.bf16.xpose.msra.mxu0 0
    %1470 = vmatprep.subr.bf16.mxu0 0
    %1471 = vmatpush1.bf16.xpose.msra.mxu0 0
    %1472 = vmatprep.subr.bf16.mxu0 0
    %1473 = vmatpush1.bf16.xpose.msra.mxu0 0
    %1474 = vmatprep.subr.bf16.mxu0 0
    %1475 = vmatpush1.bf16.xpose.msra.mxu0 0
    %1476 = vmatprep.subr.bf16.mxu0 0
    %1477 = vmatpush1.bf16.xpose.msra.mxu0 0
    %1478 = vmatprep.subr.bf16.mxu0 0
    %1479 = vmatpush1.bf16.xpose.msra.mxu0 0
    %1480 = vmatprep.subr.bf16.mxu0 0
    %1481 = vmatpush1.bf16.xpose.msra.mxu0 0
    %1482 = vmatprep.mubr.bf16.mxu0 0
    %1483 = vmatmul.mubr.bf16.gmra.mrb[0].mxu0 %v1445
    %v1484 = vpop.f32.mrb[0].mxu0
    %v1485 = vadd.f32 %v198, %v1484
    %v1486 = vpop.f32.mrb[0].mxu0
    %v1487 = vpop.f32.mrb[0].mxu0
    %v1488 = vpop.f32.mrb[0].mxu0
    %1489 = vdwg.mxu0
    %v1491 = vsel %vm142, %v1437, 0
    %1493 = vmatprep.subr.bf16.mxu0 0
    %1494 = vmatpush1.bf16.xpose.msra.mxu0 %v1491
    %1495 = vmatprep.subr.bf16.mxu0 0
    %1496 = vmatpush1.bf16.xpose.msra.mxu0 0
    %1497 = vmatprep.subr.bf16.mxu0 0
    %1498 = vmatpush1.bf16.xpose.msra.mxu0 0
    %1499 = vmatprep.subr.bf16.mxu0 0
    %1500 = vmatpush1.bf16.xpose.msra.mxu0 0
    %1501 = vmatprep.subr.bf16.mxu0 0
    %1502 = vmatpush1.bf16.xpose.msra.mxu0 0
    %1503 = vmatprep.subr.bf16.mxu0 0
    %1504 = vmatpush1.bf16.xpose.msra.mxu0 0
    %1505 = vmatprep.subr.bf16.mxu0 0
    %1506 = vmatpush1.bf16.xpose.msra.mxu0 0
    %1507 = vmatprep.subr.bf16.mxu0 0
    %1508 = vmatpush1.bf16.xpose.msra.mxu0 0
    %1509 = vmatprep.subr.bf16.mxu0 0
    %1510 = vmatpush1.bf16.xpose.msra.mxu0 0
    %1511 = vmatprep.subr.bf16.mxu0 0
    %1512 = vmatpush1.bf16.xpose.msra.mxu0 0
    %1513 = vmatprep.subr.bf16.mxu0 0
    %1514 = vmatpush1.bf16.xpose.msra.mxu0 0
    %1515 = vmatprep.subr.bf16.mxu0 0
    %1516 = vmatpush1.bf16.xpose.msra.mxu0 0
    %1517 = vmatprep.subr.bf16.mxu0 0
    %1518 = vmatpush1.bf16.xpose.msra.mxu0 0
    %1519 = vmatprep.subr.bf16.mxu0 0
    %1520 = vmatpush1.bf16.xpose.msra.mxu0 0
    %1521 = vmatprep.subr.bf16.mxu0 0
    %1522 = vmatpush1.bf16.xpose.msra.mxu0 0
    %1523 = vmatprep.subr.bf16.mxu0 0
    %1524 = vmatpush1.bf16.xpose.msra.mxu0 0
    %1525 = vmatprep.mubr.bf16.mxu0 0
    %1526 = vmatmul.mubr.bf16.gmra.mrb[0].mxu0 %v1445
    %v1527 = vpop.f32.mrb[0].mxu0
    %v1528 = vadd.f32 %v202, %v1527
    %v1529 = vpop.f32.mrb[0].mxu0
    %v1530 = vpop.f32.mrb[0].mxu0
    %v1531 = vpop.f32.mrb[0].mxu0
    %1532 = vdwg.mxu0
    %vm1533 = vcmask 60416
    %v1534 = vsel %vm1533, %v1485, -inf
    %1535 = vmax.xlane.f32.xlu0 %v1534
    %v1536 = vpop.xlane.xlu0 %1535
    %v1537 = vsel %vm1533, %v1528, -inf
    %1538 = vmax.xlane.f32.xlu0 %v1537
    %v1539 = vpop.xlane.xlu0 %1538
    %v1540 = vsub.f32 %v1485, %v1536
    %v1541 = vsub.f32 %v1528, %v1539
    %v1542 = vmul.f32 %v1540, 1.442695
    %v1543 = vpow.pop %v1542
    %v1544 = vmul.f32 %v1541, 1.442695
    %v1545 = vpow.pop %v1544
    %v1546 = vsel %vm1533, %v1543, 0.0
    %1547 = vadd.xlane.f32.xlu0 %v1546
    %v1548 = vpop.xlane.xlu0 %1547
    %v1549 = vsel %vm1533, %v1545, 0.0
    %1550 = vadd.xlane.f32.xlu0 %v1549
    %v1551 = vpop.xlane.xlu0 %1550
    %v1552 = vrcp.pop %v1548
    %v1553 = vrcp.pop %v1551
    %v1554 = vmul.f32 %v1543, %v1552
    %v1555 = vmul.f32 %v1545, %v1553
    %v1556 = vpack.c.bf16 %v1554, %v1554
    %v1557 = vpack.c.bf16 %v1555, %v1555
    %v1559 = vsel %vm207, %v1556, 0
    %v1561 = vsel %vm331, %v1436, 0
    %1563 = vmatprep.subr.bf16.mxu0 0
    %1564 = vmatpush1.bf16.msra.mxu0 %v1561
    %1565 = vmatprep.subr.bf16.mxu0 0
    %1566 = vmatpush1.bf16.msra.mxu0 0
    %1567 = vmatprep.subr.bf16.mxu0 0
    %1568 = vmatpush1.bf16.msra.mxu0 0
    %1569 = vmatprep.subr.bf16.mxu0 0
    %1570 = vmatpush1.bf16.msra.mxu0 0
    %1571 = vmatprep.subr.bf16.mxu0 0
    %1572 = vmatpush1.bf16.msra.mxu0 0
    %1573 = vmatprep.subr.bf16.mxu0 0
    %1574 = vmatpush1.bf16.msra.mxu0 0
    %1575 = vmatprep.subr.bf16.mxu0 0
    %1576 = vmatpush1.bf16.msra.mxu0 0
    %1577 = vmatprep.subr.bf16.mxu0 0
    %1578 = vmatpush1.bf16.msra.mxu0 0
    %1579 = vmatprep.subr.bf16.mxu0 0
    %1580 = vmatpush1.bf16.msra.mxu0 0
    %1581 = vmatprep.subr.bf16.mxu0 0
    %1582 = vmatpush1.bf16.msra.mxu0 0
    %1583 = vmatprep.subr.bf16.mxu0 0
    %1584 = vmatpush1.bf16.msra.mxu0 0
    %1585 = vmatprep.subr.bf16.mxu0 0
    %1586 = vmatpush1.bf16.msra.mxu0 0
    %1587 = vmatprep.subr.bf16.mxu0 0
    %1588 = vmatpush1.bf16.msra.mxu0 0
    %1589 = vmatprep.subr.bf16.mxu0 0
    %1590 = vmatpush1.bf16.msra.mxu0 0
    %1591 = vmatprep.subr.bf16.mxu0 0
    %1592 = vmatpush1.bf16.msra.mxu0 0
    %1593 = vmatprep.subr.bf16.mxu0 0
    %1594 = vmatpush1.bf16.msra.mxu0 0
    %1595 = vmatprep.mubr.bf16.mxu0 0
    %1596 = vmatmul.mubr.bf16.gmra.mrb[0].mxu0 %v1559
    %v1597 = vpop.f32.mrb[0].mxu0
    %v1598 = vadd.f32 0.0, %v1597
    %v1599 = vpop.f32.mrb[0].mxu0
    %v1600 = vpop.f32.mrb[0].mxu0
    %v1601 = vpop.f32.mrb[0].mxu0
    %1602 = vdwg.mxu0
    %v1604 = vsel %vm207, %v1557, 0
    %v1606 = vsel %vm331, %v1437, 0
    %1608 = vmatprep.subr.bf16.mxu0 0
    %1609 = vmatpush1.bf16.msra.mxu0 %v1606
    %1610 = vmatprep.subr.bf16.mxu0 0
    %1611 = vmatpush1.bf16.msra.mxu0 0
    %1612 = vmatprep.subr.bf16.mxu0 0
    %1613 = vmatpush1.bf16.msra.mxu0 0
    %1614 = vmatprep.subr.bf16.mxu0 0
    %1615 = vmatpush1.bf16.msra.mxu0 0
    %1616 = vmatprep.subr.bf16.mxu0 0
    %1617 = vmatpush1.bf16.msra.mxu0 0
    %1618 = vmatprep.subr.bf16.mxu0 0
    %1619 = vmatpush1.bf16.msra.mxu0 0
    %1620 = vmatprep.subr.bf16.mxu0 0
    %1621 = vmatpush1.bf16.msra.mxu0 0
    %1622 = vmatprep.subr.bf16.mxu0 0
    %1623 = vmatpush1.bf16.msra.mxu0 0
    %1624 = vmatprep.subr.bf16.mxu0 0
    %1625 = vmatpush1.bf16.msra.mxu0 0
    %1626 = vmatprep.subr.bf16.mxu0 0
    %1627 = vmatpush1.bf16.msra.mxu0 0
    %1628 = vmatprep.subr.bf16.mxu0 0
    %1629 = vmatpush1.bf16.msra.mxu0 0
    %1630 = vmatprep.subr.bf16.mxu0 0
    %1631 = vmatpush1.bf16.msra.mxu0 0
    %1632 = vmatprep.subr.bf16.mxu0 0
    %1633 = vmatpush1.bf16.msra.mxu0 0
    %1634 = vmatprep.subr.bf16.mxu0 0
    %1635 = vmatpush1.bf16.msra.mxu0 0
    %1636 = vmatprep.subr.bf16.mxu0 0
    %1637 = vmatpush1.bf16.msra.mxu0 0
    %1638 = vmatprep.subr.bf16.mxu0 0
    %1639 = vmatpush1.bf16.msra.mxu0 0
    %1640 = vmatprep.mubr.bf16.mxu0 0
    %1641 = vmatmul.mubr.bf16.gmra.mrb[0].mxu0 %v1604
    %v1642 = vpop.f32.mrb[0].mxu0
    %v1643 = vadd.f32 0.0, %v1642
    %v1644 = vpop.f32.mrb[0].mxu0
    %v1645 = vpop.f32.mrb[0].mxu0
    %v1646 = vpop.f32.mrb[0].mxu0
    %1647 = vdwg.mxu0
    %v1648 = vpack.c.bf16 %v1598, %v1598
    %v1649 = vpack.c.bf16 %v1643, %v1643
    %vm1650 = vcmask 254976
    %1651 = vst.msk [vmem:[#allocation11] sm:$0x3] %vm1650, %v1648
    %1652 = vst.msk [vmem:[#allocation11 + $0x2] sm:$0x3] %vm1650, %v1649
    // Predicated region
    $region78: #{tpu_custom_call.1} parent=1 // pred_check
      _
    $region79: #{tpu_custom_call.1} parent=1 // pred_check_branch
      %1654 = sbr.rel (0) target = $region81
    $region80: #{tpu_custom_call.1} parent=1 // pred_region
      %s1656 = ssub.s32 128, 128
      %1657 = vsyncadd [#allocation4], %s1656
      %s1658 = sshll.u32 [#allocation10], 4
      %s1659 = int_to_ptr.vmem [resolvable:$true] %s1658
      %1664 = dma.vmem_to_hbm [thread:$0]  %s1659, 128, %s15, [#allocation4], 64, 64, 4
    $region81: #{tpu_custom_call.1} parent=1 // pred_fallthru
      _
    // Predicated region
    $region82: #{tpu_custom_call.1} parent=1 // pred_check
      _
    $region83: #{tpu_custom_call.1} parent=1 // pred_check_branch
      %1666 = sbr.rel (0) target = $region85
    $region84: #{tpu_custom_call.1} parent=1 // pred_region
      %s1668 = ssub.s32 64, 64
      %1669 = vsyncadd [#allocation12], %s1668
      %s1670 = sshll.u32 [#allocation11], 4
      %s1671 = int_to_ptr.vmem [resolvable:$true] %s1670
      %1676 = dma.vmem_to_hbm [thread:$0]  %s1671, 64, %s16, [#allocation12], 32, 32, 2
    $region85: #{tpu_custom_call.1} parent=1 // pred_fallthru
      _
    // Predicated region
    $region86: #{tpu_custom_call.1} parent=1 // pred_check
      _
    $region87: #{tpu_custom_call.1} parent=1 // pred_check_branch
      %1678 = sbr.rel (0) target = $region89
    $region88: #{tpu_custom_call.1} parent=1 // pred_region
      %1679 = dma.done [#allocation4], 128
    $region89: #{tpu_custom_call.1} parent=1 // pred_fallthru
      _
    // Predicated region
    $region90: #{tpu_custom_call.1} parent=1 // pred_check
      _
    $region91: #{tpu_custom_call.1} parent=1 // pred_check_branch
      %1681 = sbr.rel (0) target = $region93
    $region92: #{tpu_custom_call.1} parent=1 // pred_region
      %1682 = dma.done [#allocation12], 64
    $region93: #{tpu_custom_call.1} parent=1 // pred_fallthru
      _
    %1683 = vsyncpa [#allocation3], 1
    %1684 = vsyncpa [#allocation6], 1
    %1685 = vsyncpa [#allocation9], 1
    %1686 = vsyncpa [#allocation4], 1
    %1687 = vsyncpa [#allocation12], 1

</llo_original>
